<compile_context>
chip_gen: v7x
topology: tpu7x:2x2x1
jax: 0.10.0
libtpu: 0.0.40
codegen_flags: <defaults>
</compile_context>

<pallas_src>
import functools

import numpy as np
import jax
import jax.numpy as jnp
from jax import lax
from jax.experimental import pallas as pl
from jax.experimental.pallas import tpu as pltpu

STFT_N_FFT = 64           # -> F = 33 one-sided bins
STFT_HOP = 16             # n_fft = 4 * hop (required by the in-kernel framing)
_PAD = STFT_N_FFT // 2    # center=True reflect pad
_LANES = 128
_SUBLANES = 8


def _round_up(x, m):
    return ((x + m - 1) // m) * m


def _scl_kernel(in_main_ref, tg_main_ref, in_spill_ref, tg_spill_ref, rhs_ref,
                out_ref, *, R0, TILE_T, T, L):
    # in_main/tg_main  : (C=2, R0, 128) f32 -- this tile's 128-sample waveform rows
    # in_spill/tg_spill: (C=2, 8, 128)  f32 -- next 8 rows (only row 0 is used)
    # rhs              : (128, 256)     bf16 -- block-diag window-folded DFT basis
    # out              : (8, 128)       f32 -- row0: wav lane sums, row1: [sp | ild]
    t = pl.program_id(1)

    # Frame-validity masks (phase-major layout): local frame (q + 8r) is valid
    # iff its global index t*TILE_T + q + 8r < T.  Zero frames -> zero spectra
    # -> zero contribution to every term.
    T_loc = T - t * TILE_T
    r_iota = lax.broadcasted_iota(jnp.int32, (R0, 64), 0)
    masks = [((8 * r_iota + q) < T_loc).astype(jnp.bfloat16) for q in range(8)]

    def build_frames(main_ref, spill_ref):
        # Overlapping 64-sample frames (hop 16) assembled from 128-sample rows
        # via 8 static lane-slice "phases".  Row layout of the result:
        # rows [0, TILE_T) = channel 0, rows [TILE_T, 2*TILE_T) = channel 1,
        # phase-major within each channel (frame order is irrelevant for the
        # loss as long as it is consistent across in/tgt and channels).
        blocks = []
        for c in range(2):
            full = jnp.concatenate([main_ref[c], spill_ref[c][0:1, :]],
                                   axis=0).astype(jnp.bfloat16)        # (R0+1, 128)
            lo_rows = full[0:R0, :]
            hi_rows = full[1:R0 + 1, :]
            for q in range(8):
                o = 16 * q
                if o + 64 <= 128:
                    ph = lo_rows[:, o:o + 64]
                else:
                    ph = jnp.concatenate(
                        [lo_rows[:, o:128], hi_rows[:, 0:o - 64]], axis=1)
                blocks.append(ph * masks[q])
        return jnp.concatenate(blocks, axis=0)                          # (2*TILE_T, 64)

    frames_in = build_frames(in_main_ref, in_spill_ref)
    frames_tg = build_frames(tg_main_ref, tg_spill_ref)
    lhs = jnp.concatenate([frames_in, frames_tg], axis=1)               # (2*TILE_T, 128)

    # One MXU matmul per tile: out lanes 0..127 = spectrum(in), 128..255 = spectrum(tgt)
    s = jnp.dot(lhs, rhs_ref[...], preferred_element_type=jnp.float32)  # (2*TILE_T, 256)
    re_i, im_i = s[:, 0:64], s[:, 64:128]
    re_t, im_t = s[:, 128:192], s[:, 192:256]

    mag_i = jnp.sqrt(re_i * re_i + im_i * im_i)
    mag_t = jnp.sqrt(re_t * re_t + im_t * im_t)
    sp = jnp.abs(mag_i - mag_t)                                         # (2*TILE_T, 64)

    d_re = re_i - re_t
    d_im = im_i - im_t
    ild_re = d_re[TILE_T:, :] - d_re[:TILE_T, :]                        # ch1 - ch0
    ild_im = d_im[TILE_T:, :] - d_im[:TILE_T, :]
    ild = jnp.sqrt(ild_re * ild_re + ild_im * ild_im)                   # (TILE_T, 64)

    sp_lane = jnp.sum(sp, axis=0, keepdims=True)                        # (1, 64)
    ild_lane = jnp.sum(ild, axis=0, keepdims=True)                      # (1, 64)

    # L1_wav on the raw f32 rows of this tile; mask out reflect / zero padding.
    row_i = lax.broadcasted_iota(jnp.int32, (R0, _LANES), 0)
    lane_i = lax.broadcasted_iota(jnp.int32, (R0, _LANES), 1)
    sample = (t * R0 + row_i) * _LANES + lane_i
    wmask = ((sample >= _PAD) & (sample < _PAD + L)).astype(jnp.float32)
    dwav = (jnp.abs(in_main_ref[0] - tg_main_ref[0])
            + jnp.abs(in_main_ref[1] - tg_main_ref[1])) * wmask
    wav_lane = jnp.sum(dwav, axis=0, keepdims=True)                     # (1, 128)

    out_ref[...] = jnp.concatenate(
        [wav_lane,
         jnp.concatenate([sp_lane, ild_lane], axis=1),
         jnp.zeros((_SUBLANES - 2, _LANES), jnp.float32)], axis=0)


def scl_loss(inp, tgt, n_fft=STFT_N_FFT, hop=STFT_HOP):
    assert inp.shape == tgt.shape
    B, C, L = inp.shape
    assert C == 2, "SCL rearranges with c=2 (stereo)"
    assert n_fft == 64 and hop == 16, "in-kernel framing assumes n_fft=64, hop=16"
    assert L > _PAD, "reflect padding needs L > n_fft // 2"
    F = n_fft // 2 + 1
    T = 1 + L // hop                       # torch.stft frame count (center=True)

    # ---- tile geometry -------------------------------------------------------
    # main rows must also cover every original sample for the L1_wav term
    T_eff = max(T, -(-(L + _PAD) // hop))
    tile_cap = 1024                        # frames per tile (amortize step overhead)
    nT = max(-(-T_eff // tile_cap),                       # VMEM-bounded tiles
             min(-(-4 // B), -(-T_eff // 64)),            # >=~4 grid pts for megacore/2 TCs
             1)
    TILE_T = _round_up(-(-T_eff // nT), 64)               # multiple of 64 -> R0 % 8 == 0
    R0 = TILE_T // 8                                      # 128-sample rows per tile
    NR = nT * R0 + 8                                      # + 8 spill rows for the last tile
    Ltot = NR * _LANES

    # ---- reflect pad (center=True) + zero pad, laid out as (B, C, rows, 128) -
    def prep(w):
        w2 = w.reshape(B * C, L).astype(jnp.float32)
        wp = jnp.pad(w2, ((0, 0), (_PAD, _PAD)), mode="reflect")
        wp = jnp.pad(wp, ((0, 0), (0, Ltot - (L + 2 * _PAD))))
        return wp.reshape(B, C, NR, _LANES)

    pin = prep(inp)
    ptg = prep(tgt)

    # ---- window-folded one-sided DFT basis, block-diagonal (128, 256) bf16 ---
    n = np.arange(n_fft, dtype=np.float64)
    win = 0.5 - 0.5 * np.cos(2.0 * np.pi * n / n_fft)          # periodic Hann
    f = np.arange(F, dtype=np.float64)
    ang = 2.0 * np.pi * np.outer(n, f) / n_fft
    w_half = np.zeros((n_fft, _LANES), np.float32)
    w_half[:, :F] = (win[:, None] * np.cos(ang)).astype(np.float32)           # re
    w_half[:, 64:64 + F] = (win[:, None] * -np.sin(ang)).astype(np.float32)   # im
    rhs_np = np.zeros((2 * n_fft, 2 * _LANES), np.float32)
    rhs_np[0:n_fft, 0:_LANES] = w_half                    # LHS lanes 0..63  (input frames)
    rhs_np[n_fft:, _LANES:] = w_half                      # LHS lanes 64..127 (target frames)
    rhs = jnp.asarray(rhs_np, dtype=jnp.bfloat16)

    # ---- pallas call ---------------------------------------------------------
    main_spec = pl.BlockSpec((None, C, R0, _LANES), lambda b, t: (b, 0, t, 0))
    spill_spec = pl.BlockSpec((None, C, 8, _LANES),
                              lambda b, t: (b, 0, (t + 1) * (R0 // 8), 0))
    rhs_spec = pl.BlockSpec((2 * n_fft, 2 * _LANES), lambda b, t: (0, 0))
    out_spec = pl.BlockSpec((None, None, _SUBLANES, _LANES), lambda b, t: (b, t, 0, 0))

    steps = B * nT
    cost = pl.CostEstimate(
        flops=int(2 * (2 * TILE_T) * 128 * 256 * steps),
        transcendentals=int(5 * TILE_T * 64 * steps),
        bytes_accessed=int(steps * (4 * (R0 + 8) * _LANES * 4
                                    + 128 * 256 * 2 + _SUBLANES * _LANES * 4)))

    part = pl.pallas_call(
        functools.partial(_scl_kernel, R0=R0, TILE_T=TILE_T, T=T, L=L),
        out_shape=jax.ShapeDtypeStruct((B, nT, _SUBLANES, _LANES), jnp.float32),
        grid=(B, nT),
        in_specs=[main_spec, main_spec, spill_spec, spill_spec, rhs_spec],
        out_specs=out_spec,
        compiler_params=pltpu.CompilerParams(
            dimension_semantics=("parallel", "parallel"),
            vmem_limit_bytes=32 * 1024 * 1024),
        cost_estimate=cost,
    )(pin, ptg, pin, ptg, rhs)

    wav_sum = jnp.sum(part[:, :, 0, :])
    sp_sum = jnp.sum(part[:, :, 1, 0:64])
    ild_sum = jnp.sum(part[:, :, 1, 64:128])

    return (wav_sum / (B * C * L)          # L1_wav
            + sp_sum / (B * C * T * F)     # L1_sp
            + ild_sum / (B * T * F))       # ILD complex L1


# ---------------------------- pure-JAX reference ------------------------------
def _frame(x_2d, n_fft, hop):
    pad = n_fft // 2
    xp = jnp.pad(x_2d, ((0, 0), (pad, pad)), mode="reflect")
    T = 1 + (xp.shape[1] - n_fft) // hop
    idx = jnp.arange(T)[:, None] * hop + jnp.arange(n_fft)[None, :]
    return xp[:, idx]                       # (rows, T, n_fft)


def scl_loss_ref(inp, tgt, n_fft=STFT_N_FFT, hop=STFT_HOP):
    B, C, L = inp.shape
    x = inp.reshape(B * C, L).astype(jnp.float32)
    y = tgt.reshape(B * C, L).astype(jnp.float32)
    n = jnp.arange(n_fft, dtype=jnp.float32)
    win = 0.5 - 0.5 * jnp.cos(2.0 * jnp.pi * n / n_fft)
    fx = _frame(x, n_fft, hop) * win
    fy = _frame(y, n_fft, hop) * win
    Sx = jnp.fft.rfft(fx, axis=-1)          # (B*C, T, F)
    Sy = jnp.fft.rfft(fy, axis=-1)
    l1_wav = jnp.mean(jnp.abs(x - y))
    l1_sp = jnp.mean(jnp.abs(jnp.abs(Sx) - jnp.abs(Sy)))
    Sx4 = Sx.reshape(B, C, Sx.shape[1], Sx.shape[2])
    Sy4 = Sy.reshape(B, C, Sy.shape[1], Sy.shape[2])
    l1_ild = jnp.mean(jnp.abs((Sx4[:, 1] - Sx4[:, 0]) - (Sy4[:, 1] - Sy4[:, 0])))
    return l1_wav + l1_sp + l1_ild


if __name__ == "__main__":
    key = jax.random.PRNGKey(0)
    k1, k2 = jax.random.split(key)

    # case 1: small stereo batch (single tile)
    B, C, L = 2, 2, 256
    inp = jax.random.normal(k1, (B, C, L), dtype=jnp.float32)
    tgt = jax.random.normal(k2, (B, C, L), dtype=jnp.float32)
    out = jax.block_until_ready(jax.jit(scl_loss)(inp, tgt))
    ref = jax.block_until_ready(scl_loss_ref(inp, tgt))
    assert np.isfinite(float(out))
    np.testing.assert_allclose(float(out), float(ref), rtol=5e-2, atol=1e-3)

    # case 2: multi-tile grid, L not a multiple of hop, masked padded frames
    k3, k4 = jax.random.split(k2)
    B2, C2, L2 = 1, 2, 1000
    inp2 = jax.random.normal(k3, (B2, C2, L2), dtype=jnp.float32)
    tgt2 = jax.random.normal(k4, (B2, C2, L2), dtype=jnp.float32)
    out2 = jax.block_until_ready(jax.jit(scl_loss)(inp2, tgt2))
    ref2 = jax.block_until_ready(scl_loss_ref(inp2, tgt2))
    assert np.isfinite(float(out2))
    np.testing.assert_allclose(float(out2), float(ref2), rtol=5e-2, atol=1e-3)

    print("KERNEL_OK")
</pallas_src>

<mosaic_0001>
module attributes {stable_mosaic.version = 11 : i64} {
  func.func @_scl_kernel(%arg0: i32, %arg1: i32, %arg2: memref<1x2x8x128xf32, #tpu.memory_space<vmem>>, %arg3: memref<1x2x8x128xf32, #tpu.memory_space<vmem>>, %arg4: memref<1x2x8x128xf32, #tpu.memory_space<vmem>>, %arg5: memref<1x2x8x128xf32, #tpu.memory_space<vmem>>, %arg6: memref<128x256xbf16, #tpu.memory_space<vmem>>, %arg7: memref<1x1x8x128xf32, #tpu.memory_space<vmem>>) attributes {dimension_semantics = [#tpu.dimension_semantics<parallel>, #tpu.dimension_semantics<parallel>], iteration_bounds = array<i64: 2, 1>, scalar_prefetch = 0 : i64, scratch_operands = 0 : i64, tpu.core_type = #tpu.core_type<tc>, window_params = [{transform_indices = @transform_0, window_bounds = array<i64: 1, 2, 8, 128>}, {transform_indices = @transform_1, window_bounds = array<i64: 1, 2, 8, 128>}, {transform_indices = @transform_2, window_bounds = array<i64: 1, 2, 8, 128>}, {transform_indices = @transform_3, window_bounds = array<i64: 1, 2, 8, 128>}, {pipeline_mode = #tpu.pipeline_mode<synchronous>, transform_indices = @transform_4, window_bounds = array<i64: 128, 256>}, {transform_indices = @transform_5, window_bounds = array<i64: 1, 1, 8, 128>}]} {
    %c64_i32 = arith.constant 64 : i32
    %0 = arith.muli %arg1, %c64_i32 : i32
    %c17_i32 = arith.constant 17 : i32
    %1 = arith.subi %c17_i32, %0 : i32
    %2 = tpu.iota {dimensions = array<i32: 0>} : vector<8x64xi32>
    %c8_i32 = arith.constant 8 : i32
    %3 = vector.broadcast %c8_i32 : i32 to vector<8x64xi32>
    %4 = arith.muli %3, %2 : vector<8x64xi32>
    %c0_i32 = arith.constant 0 : i32
    %5 = vector.broadcast %c0_i32 : i32 to vector<8x64xi32>
    %6 = arith.addi %4, %5 : vector<8x64xi32>
    %7 = vector.broadcast %1 : i32 to vector<8x64xi32>
    %8 = arith.cmpi slt, %6, %7 : vector<8x64xi32>
    %9 = arith.extui %8 : vector<8x64xi1> to vector<8x64xi32>
    %10 = arith.sitofp %9 : vector<8x64xi32> to vector<8x64xf32>
    %11 = arith.truncf %10 : vector<8x64xf32> to vector<8x64xbf16>
    %c8_i32_0 = arith.constant 8 : i32
    %12 = vector.broadcast %c8_i32_0 : i32 to vector<8x64xi32>
    %13 = arith.muli %12, %2 : vector<8x64xi32>
    %c1_i32 = arith.constant 1 : i32
    %14 = vector.broadcast %c1_i32 : i32 to vector<8x64xi32>
    %15 = arith.addi %13, %14 : vector<8x64xi32>
    %16 = vector.broadcast %1 : i32 to vector<8x64xi32>
    %17 = arith.cmpi slt, %15, %16 : vector<8x64xi32>
    %18 = arith.extui %17 : vector<8x64xi1> to vector<8x64xi32>
    %19 = arith.sitofp %18 : vector<8x64xi32> to vector<8x64xf32>
    %20 = arith.truncf %19 : vector<8x64xf32> to vector<8x64xbf16>
    %c8_i32_1 = arith.constant 8 : i32
    %21 = vector.broadcast %c8_i32_1 : i32 to vector<8x64xi32>
    %22 = arith.muli %21, %2 : vector<8x64xi32>
    %c2_i32 = arith.constant 2 : i32
    %23 = vector.broadcast %c2_i32 : i32 to vector<8x64xi32>
    %24 = arith.addi %22, %23 : vector<8x64xi32>
    %25 = vector.broadcast %1 : i32 to vector<8x64xi32>
    %26 = arith.cmpi slt, %24, %25 : vector<8x64xi32>
    %27 = arith.extui %26 : vector<8x64xi1> to vector<8x64xi32>
    %28 = arith.sitofp %27 : vector<8x64xi32> to vector<8x64xf32>
    %29 = arith.truncf %28 : vector<8x64xf32> to vector<8x64xbf16>
    %c8_i32_2 = arith.constant 8 : i32
    %30 = vector.broadcast %c8_i32_2 : i32 to vector<8x64xi32>
    %31 = arith.muli %30, %2 : vector<8x64xi32>
    %c3_i32 = arith.constant 3 : i32
    %32 = vector.broadcast %c3_i32 : i32 to vector<8x64xi32>
    %33 = arith.addi %31, %32 : vector<8x64xi32>
    %34 = vector.broadcast %1 : i32 to vector<8x64xi32>
    %35 = arith.cmpi slt, %33, %34 : vector<8x64xi32>
    %36 = arith.extui %35 : vector<8x64xi1> to vector<8x64xi32>
    %37 = arith.sitofp %36 : vector<8x64xi32> to vector<8x64xf32>
    %38 = arith.truncf %37 : vector<8x64xf32> to vector<8x64xbf16>
    %c8_i32_3 = arith.constant 8 : i32
    %39 = vector.broadcast %c8_i32_3 : i32 to vector<8x64xi32>
    %40 = arith.muli %39, %2 : vector<8x64xi32>
    %c4_i32 = arith.constant 4 : i32
    %41 = vector.broadcast %c4_i32 : i32 to vector<8x64xi32>
    %42 = arith.addi %40, %41 : vector<8x64xi32>
    %43 = vector.broadcast %1 : i32 to vector<8x64xi32>
    %44 = arith.cmpi slt, %42, %43 : vector<8x64xi32>
    %45 = arith.extui %44 : vector<8x64xi1> to vector<8x64xi32>
    %46 = arith.sitofp %45 : vector<8x64xi32> to vector<8x64xf32>
    %47 = arith.truncf %46 : vector<8x64xf32> to vector<8x64xbf16>
    %c8_i32_4 = arith.constant 8 : i32
    %48 = vector.broadcast %c8_i32_4 : i32 to vector<8x64xi32>
    %49 = arith.muli %48, %2 : vector<8x64xi32>
    %c5_i32 = arith.constant 5 : i32
    %50 = vector.broadcast %c5_i32 : i32 to vector<8x64xi32>
    %51 = arith.addi %49, %50 : vector<8x64xi32>
    %52 = vector.broadcast %1 : i32 to vector<8x64xi32>
    %53 = arith.cmpi slt, %51, %52 : vector<8x64xi32>
    %54 = arith.extui %53 : vector<8x64xi1> to vector<8x64xi32>
    %55 = arith.sitofp %54 : vector<8x64xi32> to vector<8x64xf32>
    %56 = arith.truncf %55 : vector<8x64xf32> to vector<8x64xbf16>
    %c8_i32_5 = arith.constant 8 : i32
    %57 = vector.broadcast %c8_i32_5 : i32 to vector<8x64xi32>
    %58 = arith.muli %57, %2 : vector<8x64xi32>
    %c6_i32 = arith.constant 6 : i32
    %59 = vector.broadcast %c6_i32 : i32 to vector<8x64xi32>
    %60 = arith.addi %58, %59 : vector<8x64xi32>
    %61 = vector.broadcast %1 : i32 to vector<8x64xi32>
    %62 = arith.cmpi slt, %60, %61 : vector<8x64xi32>
    %63 = arith.extui %62 : vector<8x64xi1> to vector<8x64xi32>
    %64 = arith.sitofp %63 : vector<8x64xi32> to vector<8x64xf32>
    %65 = arith.truncf %64 : vector<8x64xf32> to vector<8x64xbf16>
    %c8_i32_6 = arith.constant 8 : i32
    %66 = vector.broadcast %c8_i32_6 : i32 to vector<8x64xi32>
    %67 = arith.muli %66, %2 : vector<8x64xi32>
    %c7_i32 = arith.constant 7 : i32
    %68 = vector.broadcast %c7_i32 : i32 to vector<8x64xi32>
    %69 = arith.addi %67, %68 : vector<8x64xi32>
    %70 = vector.broadcast %1 : i32 to vector<8x64xi32>
    %71 = arith.cmpi slt, %69, %70 : vector<8x64xi32>
    %72 = arith.extui %71 : vector<8x64xi1> to vector<8x64xi32>
    %73 = arith.sitofp %72 : vector<8x64xi32> to vector<8x64xf32>
    %74 = arith.truncf %73 : vector<8x64xf32> to vector<8x64xbf16>
    %c0 = arith.constant 0 : index
    %c0_7 = arith.constant 0 : index
    %c0_8 = arith.constant 0 : index
    %c0_9 = arith.constant 0 : index
    %75 = vector.load %arg2[%c0, %c0_7, %c0_8, %c0_9] : memref<1x2x8x128xf32, #tpu.memory_space<vmem>>, vector<1x1x8x128xf32>
    %76 = vector.shape_cast %75 : vector<1x1x8x128xf32> to vector<8x128xf32>
    %c0_10 = arith.constant 0 : index
    %c0_11 = arith.constant 0 : index
    %c0_12 = arith.constant 0 : index
    %c0_13 = arith.constant 0 : index
    %77 = vector.load %arg4[%c0_10, %c0_11, %c0_12, %c0_13] : memref<1x2x8x128xf32, #tpu.memory_space<vmem>>, vector<1x1x8x128xf32>
    %78 = vector.shape_cast %77 : vector<1x1x8x128xf32> to vector<8x128xf32>
    %79 = vector.extract_strided_slice %78 {offsets = [0, 0], sizes = [1, 128], strides = [1, 1]} : vector<8x128xf32> to vector<1x128xf32>
    %80 = tpu.concatenate %76, %79 in 0 : vector<8x128xf32>, vector<1x128xf32> -> vector<9x128xf32>
    %81 = arith.truncf %80 : vector<9x128xf32> to vector<9x128xbf16>
    %82 = vector.extract_strided_slice %81 {offsets = [0, 0], sizes = [8, 128], strides = [1, 1]} : vector<9x128xbf16> to vector<8x128xbf16>
    %83 = vector.extract_strided_slice %81 {offsets = [1, 0], sizes = [8, 128], strides = [1, 1]} : vector<9x128xbf16> to vector<8x128xbf16>
    %84 = vector.extract_strided_slice %82 {offsets = [0, 0], sizes = [8, 64], strides = [1, 1]} : vector<8x128xbf16> to vector<8x64xbf16>
    %85 = arith.mulf %84, %11 : vector<8x64xbf16>
    %86 = vector.extract_strided_slice %82 {offsets = [0, 16], sizes = [8, 64], strides = [1, 1]} : vector<8x128xbf16> to vector<8x64xbf16>
    %87 = arith.mulf %86, %20 : vector<8x64xbf16>
    %88 = vector.extract_strided_slice %82 {offsets = [0, 32], sizes = [8, 64], strides = [1, 1]} : vector<8x128xbf16> to vector<8x64xbf16>
    %89 = arith.mulf %88, %29 : vector<8x64xbf16>
    %90 = vector.extract_strided_slice %82 {offsets = [0, 48], sizes = [8, 64], strides = [1, 1]} : vector<8x128xbf16> to vector<8x64xbf16>
    %91 = arith.mulf %90, %38 : vector<8x64xbf16>
    %92 = vector.extract_strided_slice %82 {offsets = [0, 64], sizes = [8, 64], strides = [1, 1]} : vector<8x128xbf16> to vector<8x64xbf16>
    %93 = arith.mulf %92, %47 : vector<8x64xbf16>
    %94 = vector.extract_strided_slice %82 {offsets = [0, 80], sizes = [8, 48], strides = [1, 1]} : vector<8x128xbf16> to vector<8x48xbf16>
    %95 = vector.extract_strided_slice %83 {offsets = [0, 0], sizes = [8, 16], strides = [1, 1]} : vector<8x128xbf16> to vector<8x16xbf16>
    %96 = tpu.concatenate %94, %95 in 1 : vector<8x48xbf16>, vector<8x16xbf16> -> vector<8x64xbf16>
    %97 = arith.mulf %96, %56 : vector<8x64xbf16>
    %98 = vector.extract_strided_slice %82 {offsets = [0, 96], sizes = [8, 32], strides = [1, 1]} : vector<8x128xbf16> to vector<8x32xbf16>
    %99 = vector.extract_strided_slice %83 {offsets = [0, 0], sizes = [8, 32], strides = [1, 1]} : vector<8x128xbf16> to vector<8x32xbf16>
    %100 = tpu.concatenate %98, %99 in 1 : vector<8x32xbf16>, vector<8x32xbf16> -> vector<8x64xbf16>
    %101 = arith.mulf %100, %65 : vector<8x64xbf16>
    %102 = vector.extract_strided_slice %82 {offsets = [0, 112], sizes = [8, 16], strides = [1, 1]} : vector<8x128xbf16> to vector<8x16xbf16>
    %103 = vector.extract_strided_slice %83 {offsets = [0, 0], sizes = [8, 48], strides = [1, 1]} : vector<8x128xbf16> to vector<8x48xbf16>
    %104 = tpu.concatenate %102, %103 in 1 : vector<8x16xbf16>, vector<8x48xbf16> -> vector<8x64xbf16>
    %105 = arith.mulf %104, %74 : vector<8x64xbf16>
    %c0_14 = arith.constant 0 : index
    %c1 = arith.constant 1 : index
    %c0_15 = arith.constant 0 : index
    %c0_16 = arith.constant 0 : index
    %106 = vector.load %arg2[%c0_14, %c1, %c0_15, %c0_16] : memref<1x2x8x128xf32, #tpu.memory_space<vmem>>, vector<1x1x8x128xf32>
    %107 = vector.shape_cast %106 : vector<1x1x8x128xf32> to vector<8x128xf32>
    %c0_17 = arith.constant 0 : index
    %c1_18 = arith.constant 1 : index
    %c0_19 = arith.constant 0 : index
    %c0_20 = arith.constant 0 : index
    %108 = vector.load %arg4[%c0_17, %c1_18, %c0_19, %c0_20] : memref<1x2x8x128xf32, #tpu.memory_space<vmem>>, vector<1x1x8x128xf32>
    %109 = vector.shape_cast %108 : vector<1x1x8x128xf32> to vector<8x128xf32>
    %110 = vector.extract_strided_slice %109 {offsets = [0, 0], sizes = [1, 128], strides = [1, 1]} : vector<8x128xf32> to vector<1x128xf32>
    %111 = tpu.concatenate %107, %110 in 0 : vector<8x128xf32>, vector<1x128xf32> -> vector<9x128xf32>
    %112 = arith.truncf %111 : vector<9x128xf32> to vector<9x128xbf16>
    %113 = vector.extract_strided_slice %112 {offsets = [0, 0], sizes = [8, 128], strides = [1, 1]} : vector<9x128xbf16> to vector<8x128xbf16>
    %114 = vector.extract_strided_slice %112 {offsets = [1, 0], sizes = [8, 128], strides = [1, 1]} : vector<9x128xbf16> to vector<8x128xbf16>
    %115 = vector.extract_strided_slice %113 {offsets = [0, 0], sizes = [8, 64], strides = [1, 1]} : vector<8x128xbf16> to vector<8x64xbf16>
    %116 = arith.mulf %115, %11 : vector<8x64xbf16>
    %117 = vector.extract_strided_slice %113 {offsets = [0, 16], sizes = [8, 64], strides = [1, 1]} : vector<8x128xbf16> to vector<8x64xbf16>
    %118 = arith.mulf %117, %20 : vector<8x64xbf16>
    %119 = vector.extract_strided_slice %113 {offsets = [0, 32], sizes = [8, 64], strides = [1, 1]} : vector<8x128xbf16> to vector<8x64xbf16>
    %120 = arith.mulf %119, %29 : vector<8x64xbf16>
    %121 = vector.extract_strided_slice %113 {offsets = [0, 48], sizes = [8, 64], strides = [1, 1]} : vector<8x128xbf16> to vector<8x64xbf16>
    %122 = arith.mulf %121, %38 : vector<8x64xbf16>
    %123 = vector.extract_strided_slice %113 {offsets = [0, 64], sizes = [8, 64], strides = [1, 1]} : vector<8x128xbf16> to vector<8x64xbf16>
    %124 = arith.mulf %123, %47 : vector<8x64xbf16>
    %125 = vector.extract_strided_slice %113 {offsets = [0, 80], sizes = [8, 48], strides = [1, 1]} : vector<8x128xbf16> to vector<8x48xbf16>
    %126 = vector.extract_strided_slice %114 {offsets = [0, 0], sizes = [8, 16], strides = [1, 1]} : vector<8x128xbf16> to vector<8x16xbf16>
    %127 = tpu.concatenate %125, %126 in 1 : vector<8x48xbf16>, vector<8x16xbf16> -> vector<8x64xbf16>
    %128 = arith.mulf %127, %56 : vector<8x64xbf16>
    %129 = vector.extract_strided_slice %113 {offsets = [0, 96], sizes = [8, 32], strides = [1, 1]} : vector<8x128xbf16> to vector<8x32xbf16>
    %130 = vector.extract_strided_slice %114 {offsets = [0, 0], sizes = [8, 32], strides = [1, 1]} : vector<8x128xbf16> to vector<8x32xbf16>
    %131 = tpu.concatenate %129, %130 in 1 : vector<8x32xbf16>, vector<8x32xbf16> -> vector<8x64xbf16>
    %132 = arith.mulf %131, %65 : vector<8x64xbf16>
    %133 = vector.extract_strided_slice %113 {offsets = [0, 112], sizes = [8, 16], strides = [1, 1]} : vector<8x128xbf16> to vector<8x16xbf16>
    %134 = vector.extract_strided_slice %114 {offsets = [0, 0], sizes = [8, 48], strides = [1, 1]} : vector<8x128xbf16> to vector<8x48xbf16>
    %135 = tpu.concatenate %133, %134 in 1 : vector<8x16xbf16>, vector<8x48xbf16> -> vector<8x64xbf16>
    %136 = arith.mulf %135, %74 : vector<8x64xbf16>
    %137 = tpu.concatenate %85, %87, %89, %91, %93, %97, %101, %105, %116, %118, %120, %122, %124, %128, %132, %136 in 0 : vector<8x64xbf16>, vector<8x64xbf16>, vector<8x64xbf16>, vector<8x64xbf16>, vector<8x64xbf16>, vector<8x64xbf16>, vector<8x64xbf16>, vector<8x64xbf16>, vector<8x64xbf16>, vector<8x64xbf16>, vector<8x64xbf16>, vector<8x64xbf16>, vector<8x64xbf16>, vector<8x64xbf16>, vector<8x64xbf16>, vector<8x64xbf16> -> vector<128x64xbf16>
    %c0_21 = arith.constant 0 : index
    %c0_22 = arith.constant 0 : index
    %c0_23 = arith.constant 0 : index
    %c0_24 = arith.constant 0 : index
    %138 = vector.load %arg3[%c0_21, %c0_22, %c0_23, %c0_24] : memref<1x2x8x128xf32, #tpu.memory_space<vmem>>, vector<1x1x8x128xf32>
    %139 = vector.shape_cast %138 : vector<1x1x8x128xf32> to vector<8x128xf32>
    %c0_25 = arith.constant 0 : index
    %c0_26 = arith.constant 0 : index
    %c0_27 = arith.constant 0 : index
    %c0_28 = arith.constant 0 : index
    %140 = vector.load %arg5[%c0_25, %c0_26, %c0_27, %c0_28] : memref<1x2x8x128xf32, #tpu.memory_space<vmem>>, vector<1x1x8x128xf32>
    %141 = vector.shape_cast %140 : vector<1x1x8x128xf32> to vector<8x128xf32>
    %142 = vector.extract_strided_slice %141 {offsets = [0, 0], sizes = [1, 128], strides = [1, 1]} : vector<8x128xf32> to vector<1x128xf32>
    %143 = tpu.concatenate %139, %142 in 0 : vector<8x128xf32>, vector<1x128xf32> -> vector<9x128xf32>
    %144 = arith.truncf %143 : vector<9x128xf32> to vector<9x128xbf16>
    %145 = vector.extract_strided_slice %144 {offsets = [0, 0], sizes = [8, 128], strides = [1, 1]} : vector<9x128xbf16> to vector<8x128xbf16>
    %146 = vector.extract_strided_slice %144 {offsets = [1, 0], sizes = [8, 128], strides = [1, 1]} : vector<9x128xbf16> to vector<8x128xbf16>
    %147 = vector.extract_strided_slice %145 {offsets = [0, 0], sizes = [8, 64], strides = [1, 1]} : vector<8x128xbf16> to vector<8x64xbf16>
    %148 = arith.mulf %147, %11 : vector<8x64xbf16>
    %149 = vector.extract_strided_slice %145 {offsets = [0, 16], sizes = [8, 64], strides = [1, 1]} : vector<8x128xbf16> to vector<8x64xbf16>
    %150 = arith.mulf %149, %20 : vector<8x64xbf16>
    %151 = vector.extract_strided_slice %145 {offsets = [0, 32], sizes = [8, 64], strides = [1, 1]} : vector<8x128xbf16> to vector<8x64xbf16>
    %152 = arith.mulf %151, %29 : vector<8x64xbf16>
    %153 = vector.extract_strided_slice %145 {offsets = [0, 48], sizes = [8, 64], strides = [1, 1]} : vector<8x128xbf16> to vector<8x64xbf16>
    %154 = arith.mulf %153, %38 : vector<8x64xbf16>
    %155 = vector.extract_strided_slice %145 {offsets = [0, 64], sizes = [8, 64], strides = [1, 1]} : vector<8x128xbf16> to vector<8x64xbf16>
    %156 = arith.mulf %155, %47 : vector<8x64xbf16>
    %157 = vector.extract_strided_slice %145 {offsets = [0, 80], sizes = [8, 48], strides = [1, 1]} : vector<8x128xbf16> to vector<8x48xbf16>
    %158 = vector.extract_strided_slice %146 {offsets = [0, 0], sizes = [8, 16], strides = [1, 1]} : vector<8x128xbf16> to vector<8x16xbf16>
    %159 = tpu.concatenate %157, %158 in 1 : vector<8x48xbf16>, vector<8x16xbf16> -> vector<8x64xbf16>
    %160 = arith.mulf %159, %56 : vector<8x64xbf16>
    %161 = vector.extract_strided_slice %145 {offsets = [0, 96], sizes = [8, 32], strides = [1, 1]} : vector<8x128xbf16> to vector<8x32xbf16>
    %162 = vector.extract_strided_slice %146 {offsets = [0, 0], sizes = [8, 32], strides = [1, 1]} : vector<8x128xbf16> to vector<8x32xbf16>
    %163 = tpu.concatenate %161, %162 in 1 : vector<8x32xbf16>, vector<8x32xbf16> -> vector<8x64xbf16>
    %164 = arith.mulf %163, %65 : vector<8x64xbf16>
    %165 = vector.extract_strided_slice %145 {offsets = [0, 112], sizes = [8, 16], strides = [1, 1]} : vector<8x128xbf16> to vector<8x16xbf16>
    %166 = vector.extract_strided_slice %146 {offsets = [0, 0], sizes = [8, 48], strides = [1, 1]} : vector<8x128xbf16> to vector<8x48xbf16>
    %167 = tpu.concatenate %165, %166 in 1 : vector<8x16xbf16>, vector<8x48xbf16> -> vector<8x64xbf16>
    %168 = arith.mulf %167, %74 : vector<8x64xbf16>
    %c0_29 = arith.constant 0 : index
    %c1_30 = arith.constant 1 : index
    %c0_31 = arith.constant 0 : index
    %c0_32 = arith.constant 0 : index
    %169 = vector.load %arg3[%c0_29, %c1_30, %c0_31, %c0_32] : memref<1x2x8x128xf32, #tpu.memory_space<vmem>>, vector<1x1x8x128xf32>
    %170 = vector.shape_cast %169 : vector<1x1x8x128xf32> to vector<8x128xf32>
    %c0_33 = arith.constant 0 : index
    %c1_34 = arith.constant 1 : index
    %c0_35 = arith.constant 0 : index
    %c0_36 = arith.constant 0 : index
    %171 = vector.load %arg5[%c0_33, %c1_34, %c0_35, %c0_36] : memref<1x2x8x128xf32, #tpu.memory_space<vmem>>, vector<1x1x8x128xf32>
    %172 = vector.shape_cast %171 : vector<1x1x8x128xf32> to vector<8x128xf32>
    %173 = vector.extract_strided_slice %172 {offsets = [0, 0], sizes = [1, 128], strides = [1, 1]} : vector<8x128xf32> to vector<1x128xf32>
    %174 = tpu.concatenate %170, %173 in 0 : vector<8x128xf32>, vector<1x128xf32> -> vector<9x128xf32>
    %175 = arith.truncf %174 : vector<9x128xf32> to vector<9x128xbf16>
    %176 = vector.extract_strided_slice %175 {offsets = [0, 0], sizes = [8, 128], strides = [1, 1]} : vector<9x128xbf16> to vector<8x128xbf16>
    %177 = vector.extract_strided_slice %175 {offsets = [1, 0], sizes = [8, 128], strides = [1, 1]} : vector<9x128xbf16> to vector<8x128xbf16>
    %178 = vector.extract_strided_slice %176 {offsets = [0, 0], sizes = [8, 64], strides = [1, 1]} : vector<8x128xbf16> to vector<8x64xbf16>
    %179 = arith.mulf %178, %11 : vector<8x64xbf16>
    %180 = vector.extract_strided_slice %176 {offsets = [0, 16], sizes = [8, 64], strides = [1, 1]} : vector<8x128xbf16> to vector<8x64xbf16>
    %181 = arith.mulf %180, %20 : vector<8x64xbf16>
    %182 = vector.extract_strided_slice %176 {offsets = [0, 32], sizes = [8, 64], strides = [1, 1]} : vector<8x128xbf16> to vector<8x64xbf16>
    %183 = arith.mulf %182, %29 : vector<8x64xbf16>
    %184 = vector.extract_strided_slice %176 {offsets = [0, 48], sizes = [8, 64], strides = [1, 1]} : vector<8x128xbf16> to vector<8x64xbf16>
    %185 = arith.mulf %184, %38 : vector<8x64xbf16>
    %186 = vector.extract_strided_slice %176 {offsets = [0, 64], sizes = [8, 64], strides = [1, 1]} : vector<8x128xbf16> to vector<8x64xbf16>
    %187 = arith.mulf %186, %47 : vector<8x64xbf16>
    %188 = vector.extract_strided_slice %176 {offsets = [0, 80], sizes = [8, 48], strides = [1, 1]} : vector<8x128xbf16> to vector<8x48xbf16>
    %189 = vector.extract_strided_slice %177 {offsets = [0, 0], sizes = [8, 16], strides = [1, 1]} : vector<8x128xbf16> to vector<8x16xbf16>
    %190 = tpu.concatenate %188, %189 in 1 : vector<8x48xbf16>, vector<8x16xbf16> -> vector<8x64xbf16>
    %191 = arith.mulf %190, %56 : vector<8x64xbf16>
    %192 = vector.extract_strided_slice %176 {offsets = [0, 96], sizes = [8, 32], strides = [1, 1]} : vector<8x128xbf16> to vector<8x32xbf16>
    %193 = vector.extract_strided_slice %177 {offsets = [0, 0], sizes = [8, 32], strides = [1, 1]} : vector<8x128xbf16> to vector<8x32xbf16>
    %194 = tpu.concatenate %192, %193 in 1 : vector<8x32xbf16>, vector<8x32xbf16> -> vector<8x64xbf16>
    %195 = arith.mulf %194, %65 : vector<8x64xbf16>
    %196 = vector.extract_strided_slice %176 {offsets = [0, 112], sizes = [8, 16], strides = [1, 1]} : vector<8x128xbf16> to vector<8x16xbf16>
    %197 = vector.extract_strided_slice %177 {offsets = [0, 0], sizes = [8, 48], strides = [1, 1]} : vector<8x128xbf16> to vector<8x48xbf16>
    %198 = tpu.concatenate %196, %197 in 1 : vector<8x16xbf16>, vector<8x48xbf16> -> vector<8x64xbf16>
    %199 = arith.mulf %198, %74 : vector<8x64xbf16>
    %200 = tpu.concatenate %148, %150, %152, %154, %156, %160, %164, %168, %179, %181, %183, %185, %187, %191, %195, %199 in 0 : vector<8x64xbf16>, vector<8x64xbf16>, vector<8x64xbf16>, vector<8x64xbf16>, vector<8x64xbf16>, vector<8x64xbf16>, vector<8x64xbf16>, vector<8x64xbf16>, vector<8x64xbf16>, vector<8x64xbf16>, vector<8x64xbf16>, vector<8x64xbf16>, vector<8x64xbf16>, vector<8x64xbf16>, vector<8x64xbf16>, vector<8x64xbf16> -> vector<128x64xbf16>
    %201 = tpu.concatenate %137, %200 in 1 : vector<128x64xbf16>, vector<128x64xbf16> -> vector<128x128xbf16>
    %c0_37 = arith.constant 0 : index
    %c0_38 = arith.constant 0 : index
    %202 = vector.load %arg6[%c0_37, %c0_38] : memref<128x256xbf16, #tpu.memory_space<vmem>>, vector<128x256xbf16>
    %cst = arith.constant dense<0.000000e+00> : vector<128x256xf32>
    %203 = tpu.matmul %201, %202, %cst {dimension_numbers = #tpu.dot_dimension_numbers<[1], [0], [0], [1], [0, 0, 1, 1], [], []>} : vector<128x128xbf16>, vector<128x256xbf16>, vector<128x256xf32> -> vector<128x256xf32>
    %204 = vector.extract_strided_slice %203 {offsets = [0, 0], sizes = [128, 64], strides = [1, 1]} : vector<128x256xf32> to vector<128x64xf32>
    %205 = vector.extract_strided_slice %203 {offsets = [0, 64], sizes = [128, 64], strides = [1, 1]} : vector<128x256xf32> to vector<128x64xf32>
    %206 = vector.extract_strided_slice %203 {offsets = [0, 128], sizes = [128, 64], strides = [1, 1]} : vector<128x256xf32> to vector<128x64xf32>
    %207 = vector.extract_strided_slice %203 {offsets = [0, 192], sizes = [128, 64], strides = [1, 1]} : vector<128x256xf32> to vector<128x64xf32>
    %208 = arith.mulf %204, %204 : vector<128x64xf32>
    %209 = arith.mulf %205, %205 : vector<128x64xf32>
    %210 = arith.addf %208, %209 : vector<128x64xf32>
    %211 = math.sqrt %210 : vector<128x64xf32>
    %212 = arith.mulf %206, %206 : vector<128x64xf32>
    %213 = arith.mulf %207, %207 : vector<128x64xf32>
    %214 = arith.addf %212, %213 : vector<128x64xf32>
    %215 = math.sqrt %214 : vector<128x64xf32>
    %216 = arith.subf %211, %215 : vector<128x64xf32>
    %217 = math.absf %216 : vector<128x64xf32>
    %218 = arith.subf %204, %206 : vector<128x64xf32>
    %219 = arith.subf %205, %207 : vector<128x64xf32>
    %220 = vector.extract_strided_slice %218 {offsets = [64, 0], sizes = [64, 64], strides = [1, 1]} : vector<128x64xf32> to vector<64x64xf32>
    %221 = vector.extract_strided_slice %218 {offsets = [0, 0], sizes = [64, 64], strides = [1, 1]} : vector<128x64xf32> to vector<64x64xf32>
    %222 = arith.subf %220, %221 : vector<64x64xf32>
    %223 = vector.extract_strided_slice %219 {offsets = [64, 0], sizes = [64, 64], strides = [1, 1]} : vector<128x64xf32> to vector<64x64xf32>
    %224 = vector.extract_strided_slice %219 {offsets = [0, 0], sizes = [64, 64], strides = [1, 1]} : vector<128x64xf32> to vector<64x64xf32>
    %225 = arith.subf %223, %224 : vector<64x64xf32>
    %226 = arith.mulf %222, %222 : vector<64x64xf32>
    %227 = arith.mulf %225, %225 : vector<64x64xf32>
    %228 = arith.addf %226, %227 : vector<64x64xf32>
    %229 = math.sqrt %228 : vector<64x64xf32>
    %cst_39 = arith.constant dense<0.000000e+00> : vector<64xf32>
    %230 = vector.multi_reduction <add>, %217, %cst_39 [0] : vector<128x64xf32> to vector<64xf32>
    %231 = vector.shape_cast %230 : vector<64xf32> to vector<1x64xf32>
    %cst_40 = arith.constant dense<0.000000e+00> : vector<64xf32>
    %232 = vector.multi_reduction <add>, %229, %cst_40 [0] : vector<64x64xf32> to vector<64xf32>
    %233 = vector.shape_cast %232 : vector<64xf32> to vector<1x64xf32>
    %234 = tpu.iota {dimensions = array<i32: 0>} : vector<8x128xi32>
    %235 = tpu.iota {dimensions = array<i32: 1>} : vector<8x128xi32>
    %c8_i32_41 = arith.constant 8 : i32
    %236 = arith.muli %arg1, %c8_i32_41 : i32
    %237 = vector.broadcast %236 : i32 to vector<8x128xi32>
    %238 = arith.addi %237, %234 : vector<8x128xi32>
    %c128_i32 = arith.constant 128 : i32
    %239 = vector.broadcast %c128_i32 : i32 to vector<8x128xi32>
    %240 = arith.muli %238, %239 : vector<8x128xi32>
    %241 = arith.addi %240, %235 : vector<8x128xi32>
    %c32_i32 = arith.constant 32 : i32
    %242 = vector.broadcast %c32_i32 : i32 to vector<8x128xi32>
    %243 = arith.cmpi sge, %241, %242 : vector<8x128xi32>
    %c288_i32 = arith.constant 288 : i32
    %244 = vector.broadcast %c288_i32 : i32 to vector<8x128xi32>
    %245 = arith.cmpi slt, %241, %244 : vector<8x128xi32>
    %246 = arith.andi %243, %245 : vector<8x128xi1>
    %247 = arith.extui %246 : vector<8x128xi1> to vector<8x128xi32>
    %248 = arith.sitofp %247 : vector<8x128xi32> to vector<8x128xf32>
    %c0_42 = arith.constant 0 : index
    %c0_43 = arith.constant 0 : index
    %c0_44 = arith.constant 0 : index
    %c0_45 = arith.constant 0 : index
    %249 = vector.load %arg2[%c0_42, %c0_43, %c0_44, %c0_45] : memref<1x2x8x128xf32, #tpu.memory_space<vmem>>, vector<1x1x8x128xf32>
    %250 = vector.shape_cast %249 : vector<1x1x8x128xf32> to vector<8x128xf32>
    %c0_46 = arith.constant 0 : index
    %c0_47 = arith.constant 0 : index
    %c0_48 = arith.constant 0 : index
    %c0_49 = arith.constant 0 : index
    %251 = vector.load %arg3[%c0_46, %c0_47, %c0_48, %c0_49] : memref<1x2x8x128xf32, #tpu.memory_space<vmem>>, vector<1x1x8x128xf32>
    %252 = vector.shape_cast %251 : vector<1x1x8x128xf32> to vector<8x128xf32>
    %253 = arith.subf %250, %252 : vector<8x128xf32>
    %254 = math.absf %253 : vector<8x128xf32>
    %c0_50 = arith.constant 0 : index
    %c1_51 = arith.constant 1 : index
    %c0_52 = arith.constant 0 : index
    %c0_53 = arith.constant 0 : index
    %255 = vector.load %arg2[%c0_50, %c1_51, %c0_52, %c0_53] : memref<1x2x8x128xf32, #tpu.memory_space<vmem>>, vector<1x1x8x128xf32>
    %256 = vector.shape_cast %255 : vector<1x1x8x128xf32> to vector<8x128xf32>
    %c0_54 = arith.constant 0 : index
    %c1_55 = arith.constant 1 : index
    %c0_56 = arith.constant 0 : index
    %c0_57 = arith.constant 0 : index
    %257 = vector.load %arg3[%c0_54, %c1_55, %c0_56, %c0_57] : memref<1x2x8x128xf32, #tpu.memory_space<vmem>>, vector<1x1x8x128xf32>
    %258 = vector.shape_cast %257 : vector<1x1x8x128xf32> to vector<8x128xf32>
    %259 = arith.subf %256, %258 : vector<8x128xf32>
    %260 = math.absf %259 : vector<8x128xf32>
    %261 = arith.addf %254, %260 : vector<8x128xf32>
    %262 = arith.mulf %261, %248 : vector<8x128xf32>
    %cst_58 = arith.constant dense<0.000000e+00> : vector<128xf32>
    %263 = vector.multi_reduction <add>, %262, %cst_58 [0] : vector<8x128xf32> to vector<128xf32>
    %264 = vector.shape_cast %263 : vector<128xf32> to vector<1x128xf32>
    %265 = tpu.concatenate %231, %233 in 1 : vector<1x64xf32>, vector<1x64xf32> -> vector<1x128xf32>
    %cst_59 = arith.constant 0.000000e+00 : f32
    %266 = vector.broadcast %cst_59 : f32 to vector<6x128xf32>
    %267 = tpu.concatenate %264, %265, %266 in 0 : vector<1x128xf32>, vector<1x128xf32>, vector<6x128xf32> -> vector<8x128xf32>
    %c0_60 = arith.constant 0 : index
    %c0_61 = arith.constant 0 : index
    %c0_62 = arith.constant 0 : index
    %c0_63 = arith.constant 0 : index
    %268 = vector.load %arg7[%c0_60, %c0_61, %c0_62, %c0_63] : memref<1x1x8x128xf32, #tpu.memory_space<vmem>>, vector<1x1x8x128xf32>
    %269 = vector.shape_cast %268 : vector<1x1x8x128xf32> to vector<8x128xf32>
    %270 = vector.shape_cast %267 : vector<8x128xf32> to vector<1x1x8x128xf32>
    tpu.vector_store %arg7[%c0_60, %c0_61, %c0_62, %c0_63], %270 {strides = array<i32>} : memref<1x1x8x128xf32, #tpu.memory_space<vmem>>, vector<1x1x8x128xf32>,
    return
  }
  func.func @transform_0(%arg0: i32, %arg1: i32) -> (i32, i32, i32, i32) {
    %c0_i32 = arith.constant 0 : i32
    %c0_i32_0 = arith.constant 0 : i32
    %c0_i32_1 = arith.constant 0 : i32
    return %arg0, %c0_i32, %arg1, %c0_i32_0 : i32, i32, i32, i32
  }
  func.func @transform_1(%arg0: i32, %arg1: i32) -> (i32, i32, i32, i32) {
    %c0_i32 = arith.constant 0 : i32
    %c0_i32_0 = arith.constant 0 : i32
    %c0_i32_1 = arith.constant 0 : i32
    return %arg0, %c0_i32, %arg1, %c0_i32_0 : i32, i32, i32, i32
  }
  func.func @transform_2(%arg0: i32, %arg1: i32) -> (i32, i32, i32, i32) {
    %c1_i32 = arith.constant 1 : i32
    %0 = arith.addi %arg1, %c1_i32 : i32
    %c1_i32_0 = arith.constant 1 : i32
    %1 = arith.muli %0, %c1_i32_0 : i32
    %c0_i32 = arith.constant 0 : i32
    %c0_i32_1 = arith.constant 0 : i32
    %c0_i32_2 = arith.constant 0 : i32
    return %arg0, %c0_i32, %1, %c0_i32_1 : i32, i32, i32, i32
  }
  func.func @transform_3(%arg0: i32, %arg1: i32) -> (i32, i32, i32, i32) {
    %c1_i32 = arith.constant 1 : i32
    %0 = arith.addi %arg1, %c1_i32 : i32
    %c1_i32_0 = arith.constant 1 : i32
    %1 = arith.muli %0, %c1_i32_0 : i32
    %c0_i32 = arith.constant 0 : i32
    %c0_i32_1 = arith.constant 0 : i32
    %c0_i32_2 = arith.constant 0 : i32
    return %arg0, %c0_i32, %1, %c0_i32_1 : i32, i32, i32, i32
  }
  func.func @transform_4(%arg0: i32, %arg1: i32) -> (i32, i32) {
    %c0_i32 = arith.constant 0 : i32
    %c0_i32_0 = arith.constant 0 : i32
    %c0_i32_1 = arith.constant 0 : i32
    return %c0_i32, %c0_i32_0 : i32, i32
  }
  func.func @transform_5(%arg0: i32, %arg1: i32) -> (i32, i32, i32, i32) {
    %c0_i32 = arith.constant 0 : i32
    %c0_i32_0 = arith.constant 0 : i32
    %c0_i32_1 = arith.constant 0 : i32
    return %arg0, %arg1, %c0_i32, %c0_i32_0 : i32, i32, i32, i32
  }
}

</mosaic_0001>

<llo_original>
// kernel: scl_loss.1
$region0: #{scl_loss.1}
  #allocation0 [shape = 'u32[]', space=smem, size = 0x4, offset = 0x4, fixed_abs, tag = 'smem constant byte address 0x4 - core index']
  #allocation1 [shape = 'u32[144,128]{1,0:T(1,128)}', space=vmem, size = 0x12000, scoped, tag = 'internal scratch']
  %s0 = inlined_call_operand.vmem [shape: f32[2,2,16,128], index: 0, kind: input, shape index: {}, may-alias: {0,2}]
  %s1 = inlined_call_operand.vmem [shape: f32[2,2,16,128], index: 1, kind: input, shape index: {}, may-alias: {1,3}]
  %s2 = inlined_call_operand.vmem [shape: f32[2,2,16,128], index: 2, kind: input, shape index: {}, may-alias: {0,2}]
  %s3 = inlined_call_operand.vmem [shape: f32[2,2,16,128], index: 3, kind: input, shape index: {}, may-alias: {1,3}]
  %s4 = inlined_call_operand.vmem [shape: bf16[128,256], index: 4, kind: input, shape index: {}]
  %s5 = inlined_call_operand.vmem [shape: f32[2,1,8,128], index: 5, kind: output, shape index: {}]
  %s6 = sld [smem:[#allocation0]]
  $region205: #{scl_loss.1} parent=0
    _
  %s8 = ssub.s32 1, %s6
  %s9 = scalar_select 0, %s8, %s6
  $region1: #{scl_loss.1} parent=0
    #allocation2 [shape = 'u8[16384]{0}', space=vmem, size = 0x4000, scoped, tag = 'input window, operand 0']
    #allocation3 [shape = 'u8[16384]{0}', space=vmem, size = 0x4000, scoped, tag = 'input window, operand 1']
    #allocation4 [shape = 'u8[16384]{0}', space=vmem, size = 0x4000, scoped, tag = 'input window, operand 2']
    #allocation5 [shape = 'u8[16384]{0}', space=vmem, size = 0x4000, scoped, tag = 'input window, operand 3']
    loop: start=0, step=1, limit=4
    $region2: #{scl_loss.1} parent=1 // loop_pre_header
      _
    $region3: #{scl_loss.1} parent=1 // loop_header
      %s11 = sphi 0, %s15
      %p12 = scmp.ge.s32.totalorder %s11, 4
      %s18 = sphi 0, %s30
      %s19 = sphi 0, %s26
      %s20 = sphi 0, %s18
      %s21 = sphi 0, %s19
      %s22 = sphi 0, %s20
      %s23 = sphi 0, %s21
      %s35 = sphi 0, %s37
      %s38 = sphi 0, %s35
      %s39 = sphi 0, %s38
      %s55 = sphi 0, %s39
      %s63 = sphi 0, %s65
      %s66 = sphi 0, %s63
      %s67 = sphi 0, %s66
      %s83 = sphi 0, %s67
      %s93 = sphi 0, %s95
      %s96 = sphi 0, %s93
      %s97 = sphi 0, %s96
      %s113 = sphi 0, %s97
      %s123 = sphi 0, %s125
      %s126 = sphi 0, %s123
      %s127 = sphi 0, %s126
      %s143 = sphi 0, %s127
      %s147 = sphi 0, %s147
      %s149 = sphi 0, %s147
      %s150 = sphi 0, %s149
      %s164 = sphi 0, %s150
      %s172 = sphi 0, %s174
      %s175 = sphi 0, %s172
      %s176 = sphi 0, %s175
      %s192 = sphi 0, %s176
    $region4: #{scl_loss.1} parent=1 // loop_header_branch
      %14 = sbr.rel (%p12) target = $region8
    $region5: #{scl_loss.1} parent=1 // loop_body
      %s16 = ssub.s32 %s11, 1
      %s17 = ssub.s32 %s11, 2
      %s24 = sadd.s32 1, %s19
      %p25 = scmp.ge.s32.totalorder %s24, 1
      %s26 = scalar_select %p25, 0, %s24
      %s27 = sadd.s32 1, %s18
      %s28 = scalar_select %p25, %s27, %s18
      %p29 = scmp.ge.s32.totalorder %s28, 2
      %s30 = scalar_select %p29, 0, %s28
      %s31 = ssub.s32 %s18, %s30
      %s32 = ssub.s32 %s19, %s26
      %s33 = sor.u32 %s31, %s32
      %p34 = scmp.eq.s32.totalorder %s33, 0
      %s36 = sadd.s32 %s35, 1
      %s37 = scalar_select %p34, %s35, %s36
      %p40 = pneg %p34
      %p41 = scmp.eq.s32.totalorder %s11, 1
      %p42 = por %p40, %p41
      %p43 = scmp.ne.s32.totalorder %s35, %s38
      %p44 = scmp.eq.s32.totalorder %s11, 0
      %p45 = por %p43, %p44
      %p46 = scmp.ne.s32.totalorder %s35, %s38
      %p47 = scmp.eq.s32.totalorder %s16, 1
      %p48 = por %p46, %p47
      %p49 = scmp.ne.s32.totalorder %s38, %s39
      %p50 = scmp.eq.s32.totalorder %s16, 0
      %p51 = por %p49, %p50
      %p52 = scmp.ne.s32.totalorder %s38, %s39
      %p53 = scmp.eq.s32.totalorder %s17, 1
      %p54 = por %p52, %p53
      %p56 = scmp.ne.s32.totalorder %s39, %s55
      %p57 = scmp.eq.s32.totalorder %s17, 0
      %p58 = por %p56, %p57
      %s59 = ssub.s32 %s18, %s30
      %s60 = ssub.s32 %s19, %s26
      %s61 = sor.u32 %s59, %s60
      %p62 = scmp.eq.s32.totalorder %s61, 0
      %s64 = sadd.s32 %s63, 1
      %s65 = scalar_select %p62, %s63, %s64
      %p68 = pneg %p62
      %p69 = scmp.eq.s32.totalorder %s11, 1
      %p70 = por %p68, %p69
      %p71 = scmp.ne.s32.totalorder %s63, %s66
      %p72 = scmp.eq.s32.totalorder %s11, 0
      %p73 = por %p71, %p72
      %p74 = scmp.ne.s32.totalorder %s63, %s66
      %p75 = scmp.eq.s32.totalorder %s16, 1
      %p76 = por %p74, %p75
      %p77 = scmp.ne.s32.totalorder %s66, %s67
      %p78 = scmp.eq.s32.totalorder %s16, 0
      %p79 = por %p77, %p78
      %p80 = scmp.ne.s32.totalorder %s66, %s67
      %p81 = scmp.eq.s32.totalorder %s17, 1
      %p82 = por %p80, %p81
      %p84 = scmp.ne.s32.totalorder %s67, %s83
      %p85 = scmp.eq.s32.totalorder %s17, 0
      %p86 = por %p84, %p85
      %s87 = sadd.s32 %s19, 1
      %s88 = sadd.s32 %s26, 1
      %s89 = ssub.s32 %s18, %s30
      %s90 = ssub.s32 %s87, %s88
      %s91 = sor.u32 %s89, %s90
      %p92 = scmp.eq.s32.totalorder %s91, 0
      %s94 = sadd.s32 %s93, 1
      %s95 = scalar_select %p92, %s93, %s94
      %p98 = pneg %p92
      %p99 = scmp.eq.s32.totalorder %s11, 1
      %p100 = por %p98, %p99
      %p101 = scmp.ne.s32.totalorder %s93, %s96
      %p102 = scmp.eq.s32.totalorder %s11, 0
      %p103 = por %p101, %p102
      %p104 = scmp.ne.s32.totalorder %s93, %s96
      %p105 = scmp.eq.s32.totalorder %s16, 1
      %p106 = por %p104, %p105
      %p107 = scmp.ne.s32.totalorder %s96, %s97
      %p108 = scmp.eq.s32.totalorder %s16, 0
      %p109 = por %p107, %p108
      %p110 = scmp.ne.s32.totalorder %s96, %s97
      %p111 = scmp.eq.s32.totalorder %s17, 1
      %p112 = por %p110, %p111
      %p114 = scmp.ne.s32.totalorder %s97, %s113
      %p115 = scmp.eq.s32.totalorder %s17, 0
      %p116 = por %p114, %p115
      %s117 = sadd.s32 %s19, 1
      %s118 = sadd.s32 %s26, 1
      %s119 = ssub.s32 %s18, %s30
      %s120 = ssub.s32 %s117, %s118
      %s121 = sor.u32 %s119, %s120
      %p122 = scmp.eq.s32.totalorder %s121, 0
      %s124 = sadd.s32 %s123, 1
      %s125 = scalar_select %p122, %s123, %s124
      %p128 = pneg %p122
      %p129 = scmp.eq.s32.totalorder %s11, 1
      %p130 = por %p128, %p129
      %p131 = scmp.ne.s32.totalorder %s123, %s126
      %p132 = scmp.eq.s32.totalorder %s11, 0
      %p133 = por %p131, %p132
      %p134 = scmp.ne.s32.totalorder %s123, %s126
      %p135 = scmp.eq.s32.totalorder %s16, 1
      %p136 = por %p134, %p135
      %p137 = scmp.ne.s32.totalorder %s126, %s127
      %p138 = scmp.eq.s32.totalorder %s16, 0
      %p139 = por %p137, %p138
      %p140 = scmp.ne.s32.totalorder %s126, %s127
      %p141 = scmp.eq.s32.totalorder %s17, 1
      %p142 = por %p140, %p141
      %p144 = scmp.ne.s32.totalorder %s127, %s143
      %p145 = scmp.eq.s32.totalorder %s17, 0
      %p146 = por %p144, %p145
      %s148 = sadd.s32 %s147, 1
      %p151 = scmp.eq.s32.totalorder %s11, 1
      %p152 = scmp.ne.s32.totalorder %s147, %s149
      %p153 = scmp.eq.s32.totalorder %s11, 0
      %p154 = por %p152, %p153
      %p155 = scmp.ne.s32.totalorder %s147, %s149
      %p156 = scmp.eq.s32.totalorder %s16, 1
      %p157 = por %p155, %p156
      %p158 = scmp.ne.s32.totalorder %s149, %s150
      %p159 = scmp.eq.s32.totalorder %s16, 0
      %p160 = por %p158, %p159
      %p161 = scmp.ne.s32.totalorder %s149, %s150
      %p162 = scmp.eq.s32.totalorder %s17, 1
      %p163 = por %p161, %p162
      %p165 = scmp.ne.s32.totalorder %s150, %s164
      %p166 = scmp.eq.s32.totalorder %s17, 0
      %p167 = por %p165, %p166
      %s168 = ssub.s32 %s18, %s30
      %s169 = ssub.s32 %s19, %s26
      %s170 = sor.u32 %s168, %s169
      %p171 = scmp.eq.s32.totalorder %s170, 0
      %s173 = sadd.s32 %s172, 1
      %s174 = scalar_select %p171, %s172, %s173
      %p177 = pneg %p171
      %p178 = scmp.eq.s32.totalorder %s11, 1
      %p179 = por %p177, %p178
      %p180 = scmp.ne.s32.totalorder %s172, %s175
      %p181 = scmp.eq.s32.totalorder %s11, 0
      %p182 = por %p180, %p181
      %p183 = scmp.ne.s32.totalorder %s172, %s175
      %p184 = scmp.eq.s32.totalorder %s16, 1
      %p185 = por %p183, %p184
      %p186 = scmp.ne.s32.totalorder %s175, %s176
      %p187 = scmp.eq.s32.totalorder %s16, 0
      %p188 = por %p186, %p187
      %p189 = scmp.ne.s32.totalorder %s175, %s176
      %p190 = scmp.eq.s32.totalorder %s17, 1
      %p191 = por %p189, %p190
      %p193 = scmp.ne.s32.totalorder %s176, %s192
      %p194 = scmp.eq.s32.totalorder %s17, 0
      %p195 = por %p193, %p194
      %p196 = scmp.le.s32.totalorder 1, %s11
      %p197 = scmp.lt.s32.totalorder %s11, 3
      %p198 = pnand %p196, %p197
      %p199 = pneg %p198
      // Predicated region
      $region9: #{scl_loss.1} parent=5 // pred_check
        _
      $region10: #{scl_loss.1} parent=5 // pred_check_branch
        %201 = sbr.rel (%p198) target = $region12
      $region11: #{scl_loss.1} parent=5 // pred_region
        %s202 = ssub.s32 %s11, 1
        // Predicated region
        $region13: #{scl_loss.1} parent=11 // pred_check
          %p203 = pneg %p160
        $region14: #{scl_loss.1} parent=11 // pred_check_branch
          %205 = sbr.rel (%p203) target = $region16
        $region15: #{scl_loss.1} parent=11 // pred_region
          _
        $region16: #{scl_loss.1} parent=11 // pred_fallthru
          _
      $region12: #{scl_loss.1} parent=5 // pred_fallthru
        _
      %p206 = scmp.lt.s32.totalorder %s11, 2
      // Predicated region
      $region17: #{scl_loss.1} parent=5 // pred_check
        %p207 = pneg %p206
      $region18: #{scl_loss.1} parent=5 // pred_check_branch
        %209 = sbr.rel (%p207) target = $region20
      $region19: #{scl_loss.1} parent=5 // pred_region
        // Predicated region
        $region21: #{scl_loss.1} parent=19 // pred_check
          %p210 = pneg %p45
        $region22: #{scl_loss.1} parent=19 // pred_check_branch
          %212 = sbr.rel (%p210) target = $region24
        $region23: #{scl_loss.1} parent=19 // pred_region
          %s213 = sand.u32 %s35, 1
          %s214 = sand.u32 %s35, 1
          %s215 = smul.addr %s214, 16
          %s216 = scalar_lea.vmem [#allocation2], %s215
          %s217 = smul.addr %s18, 4
          %s218 = sadd.s32 %s19, %s217
          %s219 = smul.addr %s218, 8
          %s220 = scalar_lea.vmem %s0, %s219
          // Predicated region
          $region25: #{scl_loss.1} parent=23 // pred_check
            _
          $region26: #{scl_loss.1} parent=23 // pred_check_branch
            %222 = sbr.rel (0) target = $region28
          $region27: #{scl_loss.1} parent=23 // pred_region
            // Predicated region
            $region29: #{scl_loss.1} parent=27 // pred_check
              _
            $region30: #{scl_loss.1} parent=27 // pred_check_branch
              %224 = sbr.rel (0) target = $region32
            $region31: #{scl_loss.1} parent=27 // pred_region
              // Predicated region
              $region44: #{scl_loss.1} parent=31 // pred_check
                _
              $region45: #{scl_loss.1} parent=31 // pred_check_branch
                %241 = sbr.rel (0) target = $region47
              $region46: #{scl_loss.1} parent=31 // pred_region
                loop: start=0, step=1, limit=1
                $region48: #{scl_loss.1} parent=46 // loop_pre_header
                  _
                $region49: #{scl_loss.1} parent=46 // loop_header
                  %s243 = sphi 0, %s247
                  %p244 = scmp.ge.s32.totalorder %s243, 1
                  %s248 = sphi %s220, %s220
                  %s249 = sphi %s216, %s216
                $region50: #{scl_loss.1} parent=46 // loop_header_branch
                  %246 = sbr.rel (%p244) target = $region54
                $region51: #{scl_loss.1} parent=46 // loop_body
                  %v250 = vld [vmem:[%s248] sm:$0xff]
                  %251 = vst [vmem:[%s249] sm:$0xff] %v250
                  %v252 = vld [vmem:[%s248 + $0x10] sm:$0xff]
                  %253 = vst [vmem:[%s249 + $0x8] sm:$0xff] %v252
                $region52: #{scl_loss.1} parent=46 // loop_footer
                  %s247 = sadd.s32 1, %s243
                $region53: #{scl_loss.1} parent=46 // loop_footer_branch
                  %242 = sbr.rel target = $region49
                $region54: #{scl_loss.1} parent=46 // loop_exit
                  _
              $region47: #{scl_loss.1} parent=31 // pred_fallthru
                _
              // Predicated region
              $region55: #{scl_loss.1} parent=31 // pred_check
                _
              $region56: #{scl_loss.1} parent=31 // pred_check_branch
                %255 = sbr.rel target = $region58
              $region57: #{scl_loss.1} parent=31 // pred_region
                _
              $region58: #{scl_loss.1} parent=31 // pred_fallthru
                _
            $region32: #{scl_loss.1} parent=27 // pred_fallthru
              _
            // Predicated region
            $region33: #{scl_loss.1} parent=27 // pred_check
              _
            $region34: #{scl_loss.1} parent=27 // pred_check_branch
              %226 = sbr.rel target = $region36
            $region35: #{scl_loss.1} parent=27 // pred_region
              loop: start=0, step=1, limit=1
              $region37: #{scl_loss.1} parent=35 // loop_pre_header
                _
              $region38: #{scl_loss.1} parent=35 // loop_header
                %s229 = sphi 0, %s233
                %p230 = scmp.ge.s32.totalorder %s229, 1
                %s234 = sphi %s220, %s220
                %s235 = sphi %s216, %s216
              $region39: #{scl_loss.1} parent=35 // loop_header_branch
                %232 = sbr.rel (%p230) target = $region43
              $region40: #{scl_loss.1} parent=35 // loop_body
                %v236 = vld [vmem:[%s234] sm:$0xff]
                %237 = vst [vmem:[%s235] sm:$0xff] %v236
                %v238 = vld [vmem:[%s234 + $0x10] sm:$0xff]
                %239 = vst [vmem:[%s235 + $0x8] sm:$0xff] %v238
              $region41: #{scl_loss.1} parent=35 // loop_footer
                %s233 = sadd.s32 1, %s229
              $region42: #{scl_loss.1} parent=35 // loop_footer_branch
                %228 = sbr.rel target = $region38
              $region43: #{scl_loss.1} parent=35 // loop_exit
                _
            $region36: #{scl_loss.1} parent=27 // pred_fallthru
              _
          $region28: #{scl_loss.1} parent=23 // pred_fallthru
            _
          %256 = vnop
        $region24: #{scl_loss.1} parent=19 // pred_fallthru
          _
        // Predicated region
        $region59: #{scl_loss.1} parent=19 // pred_check
          %p257 = pneg %p73
        $region60: #{scl_loss.1} parent=19 // pred_check_branch
          %259 = sbr.rel (%p257) target = $region62
        $region61: #{scl_loss.1} parent=19 // pred_region
          %s260 = sand.u32 %s63, 1
          %s261 = sand.u32 %s63, 1
          %s262 = smul.addr %s261, 16
          %s263 = scalar_lea.vmem [#allocation3], %s262
          %s264 = smul.addr %s18, 4
          %s265 = sadd.s32 %s19, %s264
          %s266 = smul.addr %s265, 8
          %s267 = scalar_lea.vmem %s1, %s266
          // Predicated region
          $region63: #{scl_loss.1} parent=61 // pred_check
            _
          $region64: #{scl_loss.1} parent=61 // pred_check_branch
            %269 = sbr.rel (0) target = $region66
          $region65: #{scl_loss.1} parent=61 // pred_region
            // Predicated region
            $region67: #{scl_loss.1} parent=65 // pred_check
              _
            $region68: #{scl_loss.1} parent=65 // pred_check_branch
              %271 = sbr.rel (0) target = $region70
            $region69: #{scl_loss.1} parent=65 // pred_region
              // Predicated region
              $region82: #{scl_loss.1} parent=69 // pred_check
                _
              $region83: #{scl_loss.1} parent=69 // pred_check_branch
                %288 = sbr.rel (0) target = $region85
              $region84: #{scl_loss.1} parent=69 // pred_region
                loop: start=0, step=1, limit=1
                $region86: #{scl_loss.1} parent=84 // loop_pre_header
                  _
                $region87: #{scl_loss.1} parent=84 // loop_header
                  %s290 = sphi 0, %s294
                  %p291 = scmp.ge.s32.totalorder %s290, 1
                  %s295 = sphi %s267, %s267
                  %s296 = sphi %s263, %s263
                $region88: #{scl_loss.1} parent=84 // loop_header_branch
                  %293 = sbr.rel (%p291) target = $region92
                $region89: #{scl_loss.1} parent=84 // loop_body
                  %v297 = vld [vmem:[%s295] sm:$0xff]
                  %298 = vst [vmem:[%s296] sm:$0xff] %v297
                  %v299 = vld [vmem:[%s295 + $0x10] sm:$0xff]
                  %300 = vst [vmem:[%s296 + $0x8] sm:$0xff] %v299
                $region90: #{scl_loss.1} parent=84 // loop_footer
                  %s294 = sadd.s32 1, %s290
                $region91: #{scl_loss.1} parent=84 // loop_footer_branch
                  %289 = sbr.rel target = $region87
                $region92: #{scl_loss.1} parent=84 // loop_exit
                  _
              $region85: #{scl_loss.1} parent=69 // pred_fallthru
                _
              // Predicated region
              $region93: #{scl_loss.1} parent=69 // pred_check
                _
              $region94: #{scl_loss.1} parent=69 // pred_check_branch
                %302 = sbr.rel target = $region96
              $region95: #{scl_loss.1} parent=69 // pred_region
                _
              $region96: #{scl_loss.1} parent=69 // pred_fallthru
                _
            $region70: #{scl_loss.1} parent=65 // pred_fallthru
              _
            // Predicated region
            $region71: #{scl_loss.1} parent=65 // pred_check
              _
            $region72: #{scl_loss.1} parent=65 // pred_check_branch
              %273 = sbr.rel target = $region74
            $region73: #{scl_loss.1} parent=65 // pred_region
              loop: start=0, step=1, limit=1
              $region75: #{scl_loss.1} parent=73 // loop_pre_header
                _
              $region76: #{scl_loss.1} parent=73 // loop_header
                %s276 = sphi 0, %s280
                %p277 = scmp.ge.s32.totalorder %s276, 1
                %s281 = sphi %s267, %s267
                %s282 = sphi %s263, %s263
              $region77: #{scl_loss.1} parent=73 // loop_header_branch
                %279 = sbr.rel (%p277) target = $region81
              $region78: #{scl_loss.1} parent=73 // loop_body
                %v283 = vld [vmem:[%s281] sm:$0xff]
                %284 = vst [vmem:[%s282] sm:$0xff] %v283
                %v285 = vld [vmem:[%s281 + $0x10] sm:$0xff]
                %286 = vst [vmem:[%s282 + $0x8] sm:$0xff] %v285
              $region79: #{scl_loss.1} parent=73 // loop_footer
                %s280 = sadd.s32 1, %s276
              $region80: #{scl_loss.1} parent=73 // loop_footer_branch
                %275 = sbr.rel target = $region76
              $region81: #{scl_loss.1} parent=73 // loop_exit
                _
            $region74: #{scl_loss.1} parent=65 // pred_fallthru
              _
          $region66: #{scl_loss.1} parent=61 // pred_fallthru
            _
          %303 = vnop
        $region62: #{scl_loss.1} parent=19 // pred_fallthru
          _
        // Predicated region
        $region97: #{scl_loss.1} parent=19 // pred_check
          %p304 = pneg %p103
        $region98: #{scl_loss.1} parent=19 // pred_check_branch
          %306 = sbr.rel (%p304) target = $region100
        $region99: #{scl_loss.1} parent=19 // pred_region
          %s307 = sand.u32 %s93, 1
          %s308 = sand.u32 %s93, 1
          %s309 = smul.addr %s308, 16
          %s310 = scalar_lea.vmem [#allocation4], %s309
          %s311 = sadd.s32 %s19, 1
          %s312 = smul.addr %s18, 4
          %s313 = sadd.s32 %s311, %s312
          %s314 = smul.addr %s313, 8
          %s315 = scalar_lea.vmem %s2, %s314
          // Predicated region
          $region101: #{scl_loss.1} parent=99 // pred_check
            _
          $region102: #{scl_loss.1} parent=99 // pred_check_branch
            %317 = sbr.rel (0) target = $region104
          $region103: #{scl_loss.1} parent=99 // pred_region
            // Predicated region
            $region105: #{scl_loss.1} parent=103 // pred_check
              _
            $region106: #{scl_loss.1} parent=103 // pred_check_branch
              %319 = sbr.rel (0) target = $region108
            $region107: #{scl_loss.1} parent=103 // pred_region
              // Predicated region
              $region120: #{scl_loss.1} parent=107 // pred_check
                _
              $region121: #{scl_loss.1} parent=107 // pred_check_branch
                %336 = sbr.rel (0) target = $region123
              $region122: #{scl_loss.1} parent=107 // pred_region
                loop: start=0, step=1, limit=1
                $region124: #{scl_loss.1} parent=122 // loop_pre_header
                  _
                $region125: #{scl_loss.1} parent=122 // loop_header
                  %s338 = sphi 0, %s342
                  %p339 = scmp.ge.s32.totalorder %s338, 1
                  %s343 = sphi %s315, %s315
                  %s344 = sphi %s310, %s310
                $region126: #{scl_loss.1} parent=122 // loop_header_branch
                  %341 = sbr.rel (%p339) target = $region130
                $region127: #{scl_loss.1} parent=122 // loop_body
                  %v345 = vld [vmem:[%s343] sm:$0xff]
                  %346 = vst [vmem:[%s344] sm:$0xff] %v345
                  %v347 = vld [vmem:[%s343 + $0x10] sm:$0xff]
                  %348 = vst [vmem:[%s344 + $0x8] sm:$0xff] %v347
                $region128: #{scl_loss.1} parent=122 // loop_footer
                  %s342 = sadd.s32 1, %s338
                $region129: #{scl_loss.1} parent=122 // loop_footer_branch
                  %337 = sbr.rel target = $region125
                $region130: #{scl_loss.1} parent=122 // loop_exit
                  _
              $region123: #{scl_loss.1} parent=107 // pred_fallthru
                _
              // Predicated region
              $region131: #{scl_loss.1} parent=107 // pred_check
                _
              $region132: #{scl_loss.1} parent=107 // pred_check_branch
                %350 = sbr.rel target = $region134
              $region133: #{scl_loss.1} parent=107 // pred_region
                _
              $region134: #{scl_loss.1} parent=107 // pred_fallthru
                _
            $region108: #{scl_loss.1} parent=103 // pred_fallthru
              _
            // Predicated region
            $region109: #{scl_loss.1} parent=103 // pred_check
              _
            $region110: #{scl_loss.1} parent=103 // pred_check_branch
              %321 = sbr.rel target = $region112
            $region111: #{scl_loss.1} parent=103 // pred_region
              loop: start=0, step=1, limit=1
              $region113: #{scl_loss.1} parent=111 // loop_pre_header
                _
              $region114: #{scl_loss.1} parent=111 // loop_header
                %s324 = sphi 0, %s328
                %p325 = scmp.ge.s32.totalorder %s324, 1
                %s329 = sphi %s315, %s315
                %s330 = sphi %s310, %s310
              $region115: #{scl_loss.1} parent=111 // loop_header_branch
                %327 = sbr.rel (%p325) target = $region119
              $region116: #{scl_loss.1} parent=111 // loop_body
                %v331 = vld [vmem:[%s329] sm:$0xff]
                %332 = vst [vmem:[%s330] sm:$0xff] %v331
                %v333 = vld [vmem:[%s329 + $0x10] sm:$0xff]
                %334 = vst [vmem:[%s330 + $0x8] sm:$0xff] %v333
              $region117: #{scl_loss.1} parent=111 // loop_footer
                %s328 = sadd.s32 1, %s324
              $region118: #{scl_loss.1} parent=111 // loop_footer_branch
                %323 = sbr.rel target = $region114
              $region119: #{scl_loss.1} parent=111 // loop_exit
                _
            $region112: #{scl_loss.1} parent=103 // pred_fallthru
              _
          $region104: #{scl_loss.1} parent=99 // pred_fallthru
            _
          %351 = vnop
        $region100: #{scl_loss.1} parent=19 // pred_fallthru
          _
        // Predicated region
        $region135: #{scl_loss.1} parent=19 // pred_check
          %p352 = pneg %p133
        $region136: #{scl_loss.1} parent=19 // pred_check_branch
          %354 = sbr.rel (%p352) target = $region138
        $region137: #{scl_loss.1} parent=19 // pred_region
          %s355 = sand.u32 %s123, 1
          %s356 = sand.u32 %s123, 1
          %s357 = smul.addr %s356, 16
          %s358 = scalar_lea.vmem [#allocation5], %s357
          %s359 = sadd.s32 %s19, 1
          %s360 = smul.addr %s18, 4
          %s361 = sadd.s32 %s359, %s360
          %s362 = smul.addr %s361, 8
          %s363 = scalar_lea.vmem %s3, %s362
          // Predicated region
          $region139: #{scl_loss.1} parent=137 // pred_check
            _
          $region140: #{scl_loss.1} parent=137 // pred_check_branch
            %365 = sbr.rel (0) target = $region142
          $region141: #{scl_loss.1} parent=137 // pred_region
            // Predicated region
            $region143: #{scl_loss.1} parent=141 // pred_check
              _
            $region144: #{scl_loss.1} parent=141 // pred_check_branch
              %367 = sbr.rel (0) target = $region146
            $region145: #{scl_loss.1} parent=141 // pred_region
              // Predicated region
              $region158: #{scl_loss.1} parent=145 // pred_check
                _
              $region159: #{scl_loss.1} parent=145 // pred_check_branch
                %384 = sbr.rel (0) target = $region161
              $region160: #{scl_loss.1} parent=145 // pred_region
                loop: start=0, step=1, limit=1
                $region162: #{scl_loss.1} parent=160 // loop_pre_header
                  _
                $region163: #{scl_loss.1} parent=160 // loop_header
                  %s386 = sphi 0, %s390
                  %p387 = scmp.ge.s32.totalorder %s386, 1
                  %s391 = sphi %s363, %s363
                  %s392 = sphi %s358, %s358
                $region164: #{scl_loss.1} parent=160 // loop_header_branch
                  %389 = sbr.rel (%p387) target = $region168
                $region165: #{scl_loss.1} parent=160 // loop_body
                  %v393 = vld [vmem:[%s391] sm:$0xff]
                  %394 = vst [vmem:[%s392] sm:$0xff] %v393
                  %v395 = vld [vmem:[%s391 + $0x10] sm:$0xff]
                  %396 = vst [vmem:[%s392 + $0x8] sm:$0xff] %v395
                $region166: #{scl_loss.1} parent=160 // loop_footer
                  %s390 = sadd.s32 1, %s386
                $region167: #{scl_loss.1} parent=160 // loop_footer_branch
                  %385 = sbr.rel target = $region163
                $region168: #{scl_loss.1} parent=160 // loop_exit
                  _
              $region161: #{scl_loss.1} parent=145 // pred_fallthru
                _
              // Predicated region
              $region169: #{scl_loss.1} parent=145 // pred_check
                _
              $region170: #{scl_loss.1} parent=145 // pred_check_branch
                %398 = sbr.rel target = $region172
              $region171: #{scl_loss.1} parent=145 // pred_region
                _
              $region172: #{scl_loss.1} parent=145 // pred_fallthru
                _
            $region146: #{scl_loss.1} parent=141 // pred_fallthru
              _
            // Predicated region
            $region147: #{scl_loss.1} parent=141 // pred_check
              _
            $region148: #{scl_loss.1} parent=141 // pred_check_branch
              %369 = sbr.rel target = $region150
            $region149: #{scl_loss.1} parent=141 // pred_region
              loop: start=0, step=1, limit=1
              $region151: #{scl_loss.1} parent=149 // loop_pre_header
                _
              $region152: #{scl_loss.1} parent=149 // loop_header
                %s372 = sphi 0, %s376
                %p373 = scmp.ge.s32.totalorder %s372, 1
                %s377 = sphi %s363, %s363
                %s378 = sphi %s358, %s358
              $region153: #{scl_loss.1} parent=149 // loop_header_branch
                %375 = sbr.rel (%p373) target = $region157
              $region154: #{scl_loss.1} parent=149 // loop_body
                %v379 = vld [vmem:[%s377] sm:$0xff]
                %380 = vst [vmem:[%s378] sm:$0xff] %v379
                %v381 = vld [vmem:[%s377 + $0x10] sm:$0xff]
                %382 = vst [vmem:[%s378 + $0x8] sm:$0xff] %v381
              $region155: #{scl_loss.1} parent=149 // loop_footer
                %s376 = sadd.s32 1, %s372
              $region156: #{scl_loss.1} parent=149 // loop_footer_branch
                %371 = sbr.rel target = $region152
              $region157: #{scl_loss.1} parent=149 // loop_exit
                _
            $region150: #{scl_loss.1} parent=141 // pred_fallthru
              _
          $region142: #{scl_loss.1} parent=137 // pred_fallthru
            _
          %399 = vnop
        $region138: #{scl_loss.1} parent=19 // pred_fallthru
          _
      $region20: #{scl_loss.1} parent=5 // pred_fallthru
        _
      %p400 = scmp.le.s32.totalorder 1, %s11
      %p401 = scmp.lt.s32.totalorder %s11, 3
      %p402 = pnand %p400, %p401
      %p403 = pneg %p402
      // Predicated region
      $region173: #{scl_loss.1} parent=5 // pred_check
        _
      $region174: #{scl_loss.1} parent=5 // pred_check_branch
        %405 = sbr.rel (%p402) target = $region176
      $region175: #{scl_loss.1} parent=5 // pred_region
        %s406 = ssub.s32 %s11, 1
        %s407 = sand.u32 %s38, 1
        %s408 = sand.u32 %s38, 1
        %s409 = smul.addr %s408, 16
        %s410 = scalar_lea.vmem [#allocation2], %s409
        // Predicated region
        $region177: #{scl_loss.1} parent=175 // pred_check
          %p411 = pneg %p51
        $region178: #{scl_loss.1} parent=175 // pred_check_branch
          %413 = sbr.rel (%p411) target = $region180
        $region179: #{scl_loss.1} parent=175 // pred_region
          _
        $region180: #{scl_loss.1} parent=175 // pred_fallthru
          _
        %s414 = sand.u32 %s66, 1
        %s415 = sand.u32 %s66, 1
        %s416 = smul.addr %s415, 16
        %s417 = scalar_lea.vmem [#allocation3], %s416
        // Predicated region
        $region181: #{scl_loss.1} parent=175 // pred_check
          %p418 = pneg %p79
        $region182: #{scl_loss.1} parent=175 // pred_check_branch
          %420 = sbr.rel (%p418) target = $region184
        $region183: #{scl_loss.1} parent=175 // pred_region
          _
        $region184: #{scl_loss.1} parent=175 // pred_fallthru
          _
        %s421 = sand.u32 %s96, 1
        %s422 = sand.u32 %s96, 1
        %s423 = smul.addr %s422, 16
        %s424 = scalar_lea.vmem [#allocation4], %s423
        // Predicated region
        $region185: #{scl_loss.1} parent=175 // pred_check
          %p425 = pneg %p109
        $region186: #{scl_loss.1} parent=175 // pred_check_branch
          %427 = sbr.rel (%p425) target = $region188
        $region187: #{scl_loss.1} parent=175 // pred_region
          _
        $region188: #{scl_loss.1} parent=175 // pred_fallthru
          _
        %s428 = sand.u32 %s126, 1
        %s429 = sand.u32 %s126, 1
        %s430 = smul.addr %s429, 16
        %s431 = scalar_lea.vmem [#allocation5], %s430
        // Predicated region
        $region189: #{scl_loss.1} parent=175 // pred_check
          %p432 = pneg %p139
        $region190: #{scl_loss.1} parent=175 // pred_check_branch
          %434 = sbr.rel (%p432) target = $region192
        $region191: #{scl_loss.1} parent=175 // pred_region
          _
        $region192: #{scl_loss.1} parent=175 // pred_fallthru
          _
        %s435 = sand.u32 %s38, 1
        %s436 = sand.u32 %s38, 1
        %s437 = smul.addr %s436, 16
        %s438 = scalar_lea.vmem [#allocation2], %s437
        %p439 = pneg %p51
        %p440 = pneg %p48
        %s441 = sand.u32 %s66, 1
        %s442 = sand.u32 %s66, 1
        %s443 = smul.addr %s442, 16
        %s444 = scalar_lea.vmem [#allocation3], %s443
        %p445 = pneg %p79
        %p446 = pneg %p76
        %s447 = sand.u32 %s96, 1
        %s448 = sand.u32 %s96, 1
        %s449 = smul.addr %s448, 16
        %s450 = scalar_lea.vmem [#allocation4], %s449
        %p451 = pneg %p109
        %p452 = pneg %p106
        %s453 = sand.u32 %s126, 1
        %s454 = sand.u32 %s126, 1
        %s455 = smul.addr %s454, 16
        %s456 = scalar_lea.vmem [#allocation5], %s455
        %p457 = pneg %p139
        %p458 = pneg %p136
        %p459 = pneg %p160
        %p460 = pneg %p157
        %p461 = pneg %p188
        %p462 = pneg %p185
        %p463 = scmp.lt.s32.totalorder %s20, 1
        %s464 = scalar_select %p463, %s20, 1
        %p465 = scmp.lt.s32.totalorder %s21, 0
        %s466 = scalar_select %p465, %s21, 0
        %s467 = sadd.s32 %s466, %s464
        %s468 = smul.addr %s467, 8
        %s469 = scalar_lea.vmem %s5, %s468
        %s470 = sadd.s32 %s21, 1
        %s471 = sadd.s32 %s21, 1
        %p472 = scmp.lt.s32.totalorder %s20, 1
        %s473 = scalar_select %p472, %s20, 1
        %p474 = scmp.lt.s32.totalorder %s21, 0
        %s475 = scalar_select %p474, %s21, 0
        %s476 = sadd.s32 %s475, %s473
        %s477 = smul.addr %s476, 8
        %s478 = scalar_lea.vmem %s5, %s477
        %s480 = smul.u32 %s21, 64
        %s481 = ssub.s32 17, %s480
        %v482 = vlaneseq
        %v483 = vshrl.u32 %v482, 7
        %v484 = vmul.u32 %v483, 8
        %v485 = vstv %s481
        %vm486 = vcmp.lt.s32.totalorder %v484, %v485
        %v487 = vsel %vm486, 1, 0
        %v488 = vcvt.s32.f32 %v487
        %v489 = vpack.c.bf16 %v488, %v488
        %v490 = vadd.s32 %v484, 1
        %vm491 = vcmp.lt.s32.totalorder %v490, %v485
        %v492 = vsel %vm491, 1, 0
        %v493 = vcvt.s32.f32 %v492
        %v494 = vpack.c.bf16 %v493, %v493
        %v495 = vadd.s32 %v484, 2
        %vm496 = vcmp.lt.s32.totalorder %v495, %v485
        %v497 = vsel %vm496, 1, 0
        %v498 = vcvt.s32.f32 %v497
        %v499 = vpack.c.bf16 %v498, %v498
        %v500 = vadd.s32 %v484, 3
        %vm501 = vcmp.lt.s32.totalorder %v500, %v485
        %v502 = vsel %vm501, 1, 0
        %v503 = vcvt.s32.f32 %v502
        %v504 = vpack.c.bf16 %v503, %v503
        %v505 = vadd.s32 %v484, 4
        %vm506 = vcmp.lt.s32.totalorder %v505, %v485
        %v507 = vsel %vm506, 1, 0
        %v508 = vcvt.s32.f32 %v507
        %v509 = vpack.c.bf16 %v508, %v508
        %v510 = vadd.s32 %v484, 5
        %vm511 = vcmp.lt.s32.totalorder %v510, %v485
        %v512 = vsel %vm511, 1, 0
        %v513 = vcvt.s32.f32 %v512
        %v514 = vpack.c.bf16 %v513, %v513
        %v515 = vadd.s32 %v484, 6
        %vm516 = vcmp.lt.s32.totalorder %v515, %v485
        %v517 = vsel %vm516, 1, 0
        %v518 = vcvt.s32.f32 %v517
        %v519 = vpack.c.bf16 %v518, %v518
        %v520 = vadd.s32 %v484, 7
        %vm521 = vcmp.lt.s32.totalorder %v520, %v485
        %v522 = vsel %vm521, 1, 0
        %v523 = vcvt.s32.f32 %v522
        %v524 = vpack.c.bf16 %v523, %v523
        %v525 = vld [vmem:[%s410] sm:$0xff]
        %v526 = vld [vmem:[%s424] sm:$0xff]
        %v527 = vpack.c.bf16 %v526, %v525
        %v528 = vmul.bf16 %v527, %v489
        %v529 = vmul.bf16 %v527, %v494
        %v530 = vmul.bf16 %v527, %v499
        %v531 = vmul.bf16 %v527, %v504
        %v532 = vmul.bf16 %v527, %v509
        %534 = vrot.lane.b32.xlu0 %v527, 48
        %v535 = vpop.permute.xlu0 %534
        %v537 = vshrl.u32 %v527, 16
        %v539 = vshll.u32 %v527, 16
        %v541 = vrot.slane %v539, 1
        %v542 = vor.u32 %v537, %v541
        %543 = vrot.lane.b32.xlu0 %v542, 48
        %v544 = vpop.permute.xlu0 %543
        %vm545 = vcmask 392192
        %v548 = vsel %vm545, %v535, %v544
        %v550 = vmul.bf16 %v548, %v514
        %551 = vrot.lane.b32.xlu0 %v527, 32
        %v552 = vpop.permute.xlu0 %551
        %553 = vrot.lane.b32.xlu0 %v542, 32
        %v554 = vpop.permute.xlu0 %553
        %vm555 = vcmask 261120
        %v558 = vsel %vm555, %v552, %v554
        %v560 = vmul.bf16 %v558, %v519
        %561 = vrot.lane.b32.xlu0 %v527, 16
        %v562 = vpop.permute.xlu0 %561
        %563 = vrot.lane.b32.xlu0 %v542, 16
        %v564 = vpop.permute.xlu0 %563
        %vm565 = vcmask 130048
        %v568 = vsel %vm565, %v562, %v564
        %v570 = vmul.bf16 %v568, %v524
        %s571 = scalar_lea.vmem %s410, 8 [#allocation2]
        %v572 = vld [vmem:[%s571] sm:$0xff]
        %s573 = scalar_lea.vmem %s424, 8 [#allocation4]
        %v574 = vld [vmem:[%s573] sm:$0xff]
        %v575 = vpack.c.bf16 %v574, %v572
        %v576 = vmul.bf16 %v575, %v489
        %v577 = vmul.bf16 %v575, %v494
        %v578 = vmul.bf16 %v575, %v499
        %v579 = vmul.bf16 %v575, %v504
        %v580 = vmul.bf16 %v575, %v509
        %582 = vrot.lane.b32.xlu0 %v575, 48
        %v583 = vpop.permute.xlu0 %582
        %v585 = vshrl.u32 %v575, 16
        %v587 = vshll.u32 %v575, 16
        %v589 = vrot.slane %v587, 1
        %v590 = vor.u32 %v585, %v589
        %591 = vrot.lane.b32.xlu0 %v590, 48
        %v592 = vpop.permute.xlu0 %591
        %v595 = vsel %vm545, %v583, %v592
        %v597 = vmul.bf16 %v595, %v514
        %598 = vrot.lane.b32.xlu0 %v575, 32
        %v599 = vpop.permute.xlu0 %598
        %600 = vrot.lane.b32.xlu0 %v590, 32
        %v601 = vpop.permute.xlu0 %600
        %v604 = vsel %vm555, %v599, %v601
        %v606 = vmul.bf16 %v604, %v519
        %607 = vrot.lane.b32.xlu0 %v575, 16
        %v608 = vpop.permute.xlu0 %607
        %609 = vrot.lane.b32.xlu0 %v590, 16
        %v610 = vpop.permute.xlu0 %609
        %v613 = vsel %vm565, %v608, %v610
        %v615 = vmul.bf16 %v613, %v524
        %v617 = vrot.slane %v529, 4
        %618 = vrot.lane.b32.xlu0 %v617, 112
        %v619 = vpop.permute.xlu0 %618
        %621 = vrot.lane.b32.xlu0 %v530, 96
        %v622 = vpop.permute.xlu0 %621
        %v624 = vrot.slane %v531, 4
        %625 = vrot.lane.b32.xlu0 %v624, 80
        %v626 = vpop.permute.xlu0 %625
        %628 = vrot.lane.b32.xlu0 %v532, 64
        %v629 = vpop.permute.xlu0 %628
        %v631 = vrot.slane %v550, 4
        %v633 = vrot.slane %v570, 4
        %v635 = vrot.slane %v577, 4
        %636 = vrot.lane.b32.xlu0 %v635, 112
        %v637 = vpop.permute.xlu0 %636
        %639 = vrot.lane.b32.xlu0 %v578, 96
        %v640 = vpop.permute.xlu0 %639
        %v642 = vrot.slane %v579, 4
        %643 = vrot.lane.b32.xlu0 %v642, 80
        %v644 = vpop.permute.xlu0 %643
        %646 = vrot.lane.b32.xlu0 %v580, 64
        %v647 = vpop.permute.xlu0 %646
        %v649 = vrot.slane %v597, 4
        %v651 = vrot.slane %v615, 4
        %vm652 = vcmask 1043456
        %v655 = vsel %vm652, %v528, %v619
        %v658 = vsel %vm652, %v622, %v626
        %v661 = vsel %vm652, %v629, %v631
        %v664 = vsel %vm652, %v560, %v633
        %v667 = vsel %vm652, %v576, %v637
        %v670 = vsel %vm652, %v640, %v644
        %v673 = vsel %vm652, %v647, %v649
        %v676 = vsel %vm652, %v606, %v651
        %v677 = vld [vmem:[%s417] sm:$0xff]
        %v678 = vld [vmem:[%s431] sm:$0xff]
        %v679 = vpack.c.bf16 %v678, %v677
        %v680 = vmul.bf16 %v679, %v489
        %v681 = vmul.bf16 %v679, %v494
        %v682 = vmul.bf16 %v679, %v499
        %v683 = vmul.bf16 %v679, %v504
        %v684 = vmul.bf16 %v679, %v509
        %686 = vrot.lane.b32.xlu0 %v679, 48
        %v687 = vpop.permute.xlu0 %686
        %v689 = vshrl.u32 %v679, 16
        %v691 = vshll.u32 %v679, 16
        %v693 = vrot.slane %v691, 1
        %v694 = vor.u32 %v689, %v693
        %695 = vrot.lane.b32.xlu0 %v694, 48
        %v696 = vpop.permute.xlu0 %695
        %v699 = vsel %vm545, %v687, %v696
        %v701 = vmul.bf16 %v699, %v514
        %702 = vrot.lane.b32.xlu0 %v679, 32
        %v703 = vpop.permute.xlu0 %702
        %704 = vrot.lane.b32.xlu0 %v694, 32
        %v705 = vpop.permute.xlu0 %704
        %v708 = vsel %vm555, %v703, %v705
        %v710 = vmul.bf16 %v708, %v519
        %711 = vrot.lane.b32.xlu0 %v679, 16
        %v712 = vpop.permute.xlu0 %711
        %713 = vrot.lane.b32.xlu0 %v694, 16
        %v714 = vpop.permute.xlu0 %713
        %v717 = vsel %vm565, %v712, %v714
        %v719 = vmul.bf16 %v717, %v524
        %s720 = scalar_lea.vmem %s417, 8 [#allocation3]
        %v721 = vld [vmem:[%s720] sm:$0xff]
        %s722 = scalar_lea.vmem %s431, 8 [#allocation5]
        %v723 = vld [vmem:[%s722] sm:$0xff]
        %v724 = vpack.c.bf16 %v723, %v721
        %v725 = vmul.bf16 %v724, %v489
        %v726 = vmul.bf16 %v724, %v494
        %v727 = vmul.bf16 %v724, %v499
        %v728 = vmul.bf16 %v724, %v504
        %v729 = vmul.bf16 %v724, %v509
        %731 = vrot.lane.b32.xlu0 %v724, 48
        %v732 = vpop.permute.xlu0 %731
        %v734 = vshrl.u32 %v724, 16
        %v736 = vshll.u32 %v724, 16
        %v738 = vrot.slane %v736, 1
        %v739 = vor.u32 %v734, %v738
        %740 = vrot.lane.b32.xlu0 %v739, 48
        %v741 = vpop.permute.xlu0 %740
        %v744 = vsel %vm545, %v732, %v741
        %v746 = vmul.bf16 %v744, %v514
        %747 = vrot.lane.b32.xlu0 %v724, 32
        %v748 = vpop.permute.xlu0 %747
        %749 = vrot.lane.b32.xlu0 %v739, 32
        %v750 = vpop.permute.xlu0 %749
        %v753 = vsel %vm555, %v748, %v750
        %v755 = vmul.bf16 %v753, %v519
        %756 = vrot.lane.b32.xlu0 %v724, 16
        %v757 = vpop.permute.xlu0 %756
        %758 = vrot.lane.b32.xlu0 %v739, 16
        %v759 = vpop.permute.xlu0 %758
        %v762 = vsel %vm565, %v757, %v759
        %v764 = vmul.bf16 %v762, %v524
        %v766 = vrot.slane %v681, 4
        %767 = vrot.lane.b32.xlu0 %v766, 112
        %v768 = vpop.permute.xlu0 %767
        %770 = vrot.lane.b32.xlu0 %v682, 96
        %v771 = vpop.permute.xlu0 %770
        %v773 = vrot.slane %v683, 4
        %774 = vrot.lane.b32.xlu0 %v773, 80
        %v775 = vpop.permute.xlu0 %774
        %777 = vrot.lane.b32.xlu0 %v684, 64
        %v778 = vpop.permute.xlu0 %777
        %v780 = vrot.slane %v701, 4
        %v782 = vrot.slane %v719, 4
        %v784 = vrot.slane %v726, 4
        %785 = vrot.lane.b32.xlu0 %v784, 112
        %v786 = vpop.permute.xlu0 %785
        %788 = vrot.lane.b32.xlu0 %v727, 96
        %v789 = vpop.permute.xlu0 %788
        %v791 = vrot.slane %v728, 4
        %792 = vrot.lane.b32.xlu0 %v791, 80
        %v793 = vpop.permute.xlu0 %792
        %795 = vrot.lane.b32.xlu0 %v729, 64
        %v796 = vpop.permute.xlu0 %795
        %v798 = vrot.slane %v746, 4
        %v800 = vrot.slane %v764, 4
        %v803 = vsel %vm652, %v680, %v768
        %v806 = vsel %vm652, %v771, %v775
        %v809 = vsel %vm652, %v778, %v780
        %v812 = vsel %vm652, %v710, %v782
        %v815 = vsel %vm652, %v725, %v786
        %v818 = vsel %vm652, %v789, %v793
        %v821 = vsel %vm652, %v796, %v798
        %v824 = vsel %vm652, %v755, %v800
        %833 = vrot.lane.b32.xlu0 %v803, 64
        %v834 = vpop.permute.xlu0 %833
        %835 = vrot.lane.b32.xlu0 %v806, 64
        %v836 = vpop.permute.xlu0 %835
        %837 = vrot.lane.b32.xlu0 %v809, 64
        %v838 = vpop.permute.xlu0 %837
        %839 = vrot.lane.b32.xlu0 %v812, 64
        %v840 = vpop.permute.xlu0 %839
        %841 = vrot.lane.b32.xlu0 %v815, 64
        %v842 = vpop.permute.xlu0 %841
        %843 = vrot.lane.b32.xlu0 %v818, 64
        %v844 = vpop.permute.xlu0 %843
        %845 = vrot.lane.b32.xlu0 %v821, 64
        %v846 = vpop.permute.xlu0 %845
        %847 = vrot.lane.b32.xlu0 %v824, 64
        %v848 = vpop.permute.xlu0 %847
        %vm849 = vcmask 523264
        %v851 = vsel %vm849, %v655, %v834
        %v854 = vsel %vm849, %v658, %v836
        %v857 = vsel %vm849, %v661, %v838
        %v860 = vsel %vm849, %v664, %v840
        %v863 = vsel %vm849, %v667, %v842
        %v866 = vsel %vm849, %v670, %v844
        %v869 = vsel %vm849, %v673, %v846
        %v872 = vsel %vm849, %v676, %v848
        %v874 = vld [vmem:[%s4] sm:$0xff]
        %v875 = vld [vmem:[%s4 + $0x8] sm:$0xff]
        %v876 = vld [vmem:[%s4 + $0x10] sm:$0xff]
        %v877 = vld [vmem:[%s4 + $0x18] sm:$0xff]
        %v878 = vld [vmem:[%s4 + $0x20] sm:$0xff]
        %v879 = vld [vmem:[%s4 + $0x28] sm:$0xff]
        %v880 = vld [vmem:[%s4 + $0x30] sm:$0xff]
        %v881 = vld [vmem:[%s4 + $0x38] sm:$0xff]
        %v882 = vld [vmem:[%s4 + $0x40] sm:$0xff]
        %v883 = vld [vmem:[%s4 + $0x48] sm:$0xff]
        %v884 = vld [vmem:[%s4 + $0x50] sm:$0xff]
        %v885 = vld [vmem:[%s4 + $0x58] sm:$0xff]
        %v886 = vld [vmem:[%s4 + $0x60] sm:$0xff]
        %v887 = vld [vmem:[%s4 + $0x68] sm:$0xff]
        %v888 = vld [vmem:[%s4 + $0x70] sm:$0xff]
        %v889 = vld [vmem:[%s4 + $0x78] sm:$0xff]
        %v906 = vunpack.c.l.b16 %v874
        %v907 = vunpack.c.h.b16 %v874
        %v908 = vunpack.c.l.b16 %v875
        %v909 = vunpack.c.h.b16 %v875
        %v910 = vunpack.c.l.b16 %v876
        %v911 = vunpack.c.h.b16 %v876
        %v912 = vunpack.c.l.b16 %v877
        %v913 = vunpack.c.h.b16 %v877
        %v914 = vunpack.c.l.b16 %v878
        %v915 = vunpack.c.h.b16 %v878
        %v916 = vunpack.c.l.b16 %v879
        %v917 = vunpack.c.h.b16 %v879
        %v918 = vunpack.c.l.b16 %v880
        %v919 = vunpack.c.h.b16 %v880
        %v920 = vunpack.c.l.b16 %v881
        %v921 = vunpack.c.h.b16 %v881
        %v922 = vunpack.c.l.b16 %v882
        %v923 = vunpack.c.h.b16 %v882
        %v924 = vunpack.c.l.b16 %v883
        %v925 = vunpack.c.h.b16 %v883
        %v926 = vunpack.c.l.b16 %v884
        %v927 = vunpack.c.h.b16 %v884
        %v928 = vunpack.c.l.b16 %v885
        %v929 = vunpack.c.h.b16 %v885
        %v930 = vunpack.c.l.b16 %v886
        %v931 = vunpack.c.h.b16 %v886
        %v932 = vunpack.c.l.b16 %v887
        %v933 = vunpack.c.h.b16 %v887
        %v934 = vunpack.c.l.b16 %v888
        %v935 = vunpack.c.h.b16 %v888
        %v936 = vunpack.c.l.b16 %v889
        %v937 = vunpack.c.h.b16 %v889
        %v938 = vpack.c.b16 %v908, %v906
        %v939 = vpack.c.b16 %v909, %v907
        %v940 = vpack.c.b16 %v912, %v910
        %v941 = vpack.c.b16 %v913, %v911
        %v942 = vpack.c.b16 %v916, %v914
        %v943 = vpack.c.b16 %v917, %v915
        %v944 = vpack.c.b16 %v920, %v918
        %v945 = vpack.c.b16 %v921, %v919
        %v946 = vpack.c.b16 %v924, %v922
        %v947 = vpack.c.b16 %v925, %v923
        %v948 = vpack.c.b16 %v928, %v926
        %v949 = vpack.c.b16 %v929, %v927
        %v950 = vpack.c.b16 %v932, %v930
        %v951 = vpack.c.b16 %v933, %v931
        %v952 = vpack.c.b16 %v936, %v934
        %v953 = vpack.c.b16 %v937, %v935
        %970 = vmatprep.subr.bf16.mxu0 %v939
        %971 = vmatpush1.bf16.msra.mxu0 %v938
        %972 = vmatprep.subr.bf16.mxu0 %v941
        %973 = vmatpush1.bf16.msra.mxu0 %v940
        %974 = vmatprep.subr.bf16.mxu0 %v943
        %975 = vmatpush1.bf16.msra.mxu0 %v942
        %976 = vmatprep.subr.bf16.mxu0 %v945
        %977 = vmatpush1.bf16.msra.mxu0 %v944
        %978 = vmatprep.subr.bf16.mxu0 %v947
        %979 = vmatpush1.bf16.msra.mxu0 %v946
        %980 = vmatprep.subr.bf16.mxu0 %v949
        %981 = vmatpush1.bf16.msra.mxu0 %v948
        %982 = vmatprep.subr.bf16.mxu0 %v951
        %983 = vmatpush1.bf16.msra.mxu0 %v950
        %984 = vmatprep.subr.bf16.mxu0 %v953
        %985 = vmatpush1.bf16.msra.mxu0 %v952
        %986 = vmatprep.subr.bf16.mxu0 0
        %987 = vmatpush1.bf16.msra.mxu0 0
        %988 = vmatprep.subr.bf16.mxu0 0
        %989 = vmatpush1.bf16.msra.mxu0 0
        %990 = vmatprep.subr.bf16.mxu0 0
        %991 = vmatpush1.bf16.msra.mxu0 0
        %992 = vmatprep.subr.bf16.mxu0 0
        %993 = vmatpush1.bf16.msra.mxu0 0
        %994 = vmatprep.subr.bf16.mxu0 0
        %995 = vmatpush1.bf16.msra.mxu0 0
        %996 = vmatprep.subr.bf16.mxu0 0
        %997 = vmatpush1.bf16.msra.mxu0 0
        %998 = vmatprep.subr.bf16.mxu0 0
        %999 = vmatpush1.bf16.msra.mxu0 0
        %1000 = vmatprep.subr.bf16.mxu0 0
        %1001 = vmatpush1.bf16.msra.mxu0 0
        %1002 = vmatprep.mubr.bf16.mxu0 0
        %1003 = vmatmul.mubr.bf16.gmra.mrb[0].mxu0 %v851
        %v1004 = vpop.f32.mrb[0].mxu0
        %v1005 = vadd.f32 0.0, %v1004
        %v1006 = vpop.f32.mrb[0].mxu0
        %v1007 = vadd.f32 0.0, %v1006
        %v1008 = vpop.f32.mrb[0].mxu0
        %v1009 = vadd.f32 0.0, %v1008
        %v1010 = vpop.f32.mrb[0].mxu0
        %v1011 = vadd.f32 0.0, %v1010
        %1012 = vmatprep.mubr.bf16.mxu0 0
        %1013 = vmatmul.mubr.bf16.gmra.mrb[0].mxu0 %v854
        %v1014 = vpop.f32.mrb[0].mxu0
        %v1015 = vadd.f32 0.0, %v1014
        %v1016 = vpop.f32.mrb[0].mxu0
        %v1017 = vadd.f32 0.0, %v1016
        %v1018 = vpop.f32.mrb[0].mxu0
        %v1019 = vadd.f32 0.0, %v1018
        %v1020 = vpop.f32.mrb[0].mxu0
        %v1021 = vadd.f32 0.0, %v1020
        %1022 = vmatprep.mubr.bf16.mxu0 0
        %1023 = vmatmul.mubr.bf16.gmra.mrb[0].mxu0 %v857
        %v1024 = vpop.f32.mrb[0].mxu0
        %v1025 = vadd.f32 0.0, %v1024
        %v1026 = vpop.f32.mrb[0].mxu0
        %v1027 = vadd.f32 0.0, %v1026
        %v1028 = vpop.f32.mrb[0].mxu0
        %v1029 = vadd.f32 0.0, %v1028
        %v1030 = vpop.f32.mrb[0].mxu0
        %v1031 = vadd.f32 0.0, %v1030
        %1032 = vmatprep.mubr.bf16.mxu0 0
        %1033 = vmatmul.mubr.bf16.gmra.mrb[0].mxu0 %v860
        %v1034 = vpop.f32.mrb[0].mxu0
        %v1035 = vadd.f32 0.0, %v1034
        %v1036 = vpop.f32.mrb[0].mxu0
        %v1037 = vadd.f32 0.0, %v1036
        %v1038 = vpop.f32.mrb[0].mxu0
        %v1039 = vadd.f32 0.0, %v1038
        %v1040 = vpop.f32.mrb[0].mxu0
        %v1041 = vadd.f32 0.0, %v1040
        %1042 = vmatprep.mubr.bf16.mxu0 0
        %1043 = vmatmul.mubr.bf16.gmra.mrb[0].mxu0 %v863
        %v1044 = vpop.f32.mrb[0].mxu0
        %v1045 = vadd.f32 0.0, %v1044
        %v1046 = vpop.f32.mrb[0].mxu0
        %v1047 = vadd.f32 0.0, %v1046
        %v1048 = vpop.f32.mrb[0].mxu0
        %v1049 = vadd.f32 0.0, %v1048
        %v1050 = vpop.f32.mrb[0].mxu0
        %v1051 = vadd.f32 0.0, %v1050
        %1052 = vmatprep.mubr.bf16.mxu0 0
        %1053 = vmatmul.mubr.bf16.gmra.mrb[0].mxu0 %v866
        %v1054 = vpop.f32.mrb[0].mxu0
        %v1055 = vadd.f32 0.0, %v1054
        %v1056 = vpop.f32.mrb[0].mxu0
        %v1057 = vadd.f32 0.0, %v1056
        %v1058 = vpop.f32.mrb[0].mxu0
        %v1059 = vadd.f32 0.0, %v1058
        %v1060 = vpop.f32.mrb[0].mxu0
        %v1061 = vadd.f32 0.0, %v1060
        %1062 = vmatprep.mubr.bf16.mxu0 0
        %1063 = vmatmul.mubr.bf16.gmra.mrb[0].mxu0 %v869
        %v1064 = vpop.f32.mrb[0].mxu0
        %v1065 = vadd.f32 0.0, %v1064
        %v1066 = vpop.f32.mrb[0].mxu0
        %v1067 = vadd.f32 0.0, %v1066
        %v1068 = vpop.f32.mrb[0].mxu0
        %v1069 = vadd.f32 0.0, %v1068
        %v1070 = vpop.f32.mrb[0].mxu0
        %v1071 = vadd.f32 0.0, %v1070
        %1072 = vmatprep.mubr.bf16.mxu0 0
        %1073 = vmatmul.mubr.bf16.gmra.mrb[0].mxu0 %v872
        %v1074 = vpop.f32.mrb[0].mxu0
        %v1075 = vadd.f32 0.0, %v1074
        %v1076 = vpop.f32.mrb[0].mxu0
        %v1077 = vadd.f32 0.0, %v1076
        %v1078 = vpop.f32.mrb[0].mxu0
        %v1079 = vadd.f32 0.0, %v1078
        %v1080 = vpop.f32.mrb[0].mxu0
        %v1081 = vadd.f32 0.0, %v1080
        %1082 = vdwg.mxu0
        %v1083 = vmul.f32 %v1005, %v1005
        %v1084 = vmul.f32 %v1009, %v1009
        %v1085 = vmul.f32 %v1015, %v1015
        %v1086 = vmul.f32 %v1019, %v1019
        %v1087 = vmul.f32 %v1025, %v1025
        %v1088 = vmul.f32 %v1029, %v1029
        %v1089 = vmul.f32 %v1035, %v1035
        %v1090 = vmul.f32 %v1039, %v1039
        %v1091 = vmul.f32 %v1045, %v1045
        %v1092 = vmul.f32 %v1049, %v1049
        %v1093 = vmul.f32 %v1055, %v1055
        %v1094 = vmul.f32 %v1059, %v1059
        %v1095 = vmul.f32 %v1065, %v1065
        %v1096 = vmul.f32 %v1069, %v1069
        %v1097 = vmul.f32 %v1075, %v1075
        %v1098 = vmul.f32 %v1079, %v1079
        %1115 = vrot.lane.b32.xlu0 %v1083, 64
        %v1116 = vpop.permute.xlu0 %1115
        %1117 = vrot.lane.b32.xlu0 %v1084, 64
        %v1118 = vpop.permute.xlu0 %1117
        %1119 = vrot.lane.b32.xlu0 %v1085, 64
        %v1120 = vpop.permute.xlu0 %1119
        %1121 = vrot.lane.b32.xlu0 %v1086, 64
        %v1122 = vpop.permute.xlu0 %1121
        %1123 = vrot.lane.b32.xlu0 %v1087, 64
        %v1124 = vpop.permute.xlu0 %1123
        %1125 = vrot.lane.b32.xlu0 %v1088, 64
        %v1126 = vpop.permute.xlu0 %1125
        %1127 = vrot.lane.b32.xlu0 %v1089, 64
        %v1128 = vpop.permute.xlu0 %1127
        %1129 = vrot.lane.b32.xlu0 %v1090, 64
        %v1130 = vpop.permute.xlu0 %1129
        %1131 = vrot.lane.b32.xlu0 %v1091, 64
        %v1132 = vpop.permute.xlu0 %1131
        %1133 = vrot.lane.b32.xlu0 %v1092, 64
        %v1134 = vpop.permute.xlu0 %1133
        %1135 = vrot.lane.b32.xlu0 %v1093, 64
        %v1136 = vpop.permute.xlu0 %1135
        %1137 = vrot.lane.b32.xlu0 %v1094, 64
        %v1138 = vpop.permute.xlu0 %1137
        %1139 = vrot.lane.b32.xlu0 %v1095, 64
        %v1140 = vpop.permute.xlu0 %1139
        %1141 = vrot.lane.b32.xlu0 %v1096, 64
        %v1142 = vpop.permute.xlu0 %1141
        %1143 = vrot.lane.b32.xlu0 %v1097, 64
        %v1144 = vpop.permute.xlu0 %1143
        %1145 = vrot.lane.b32.xlu0 %v1098, 64
        %v1146 = vpop.permute.xlu0 %1145
        %v1163 = vadd.f32 %v1083, %v1116
        %v1164 = vadd.f32 %v1084, %v1118
        %v1165 = vadd.f32 %v1085, %v1120
        %v1166 = vadd.f32 %v1086, %v1122
        %v1167 = vadd.f32 %v1087, %v1124
        %v1168 = vadd.f32 %v1088, %v1126
        %v1169 = vadd.f32 %v1089, %v1128
        %v1170 = vadd.f32 %v1090, %v1130
        %v1171 = vadd.f32 %v1091, %v1132
        %v1172 = vadd.f32 %v1092, %v1134
        %v1173 = vadd.f32 %v1093, %v1136
        %v1174 = vadd.f32 %v1094, %v1138
        %v1175 = vadd.f32 %v1095, %v1140
        %v1176 = vadd.f32 %v1096, %v1142
        %v1177 = vadd.f32 %v1097, %v1144
        %v1178 = vadd.f32 %v1098, %v1146
        %v1179 = vrsqrt.pop %v1163
        %v1180 = vmul.f32 %v1163, %v1179
        %vm1181 = vcmp.eq.f32.partialorder %v1163, inf
        %v1182 = vsel %vm1181, %v1163, %v1180
        %vm1183 = vcmp.eq.f32.partialorder %v1163, 0.0
        %v1184 = vand.u32 %v1163, 2147483648
        %v1185 = vsel %vm1183, %v1184, %v1182
        %v1186 = vrsqrt.pop %v1164
        %v1187 = vmul.f32 %v1164, %v1186
        %vm1188 = vcmp.eq.f32.partialorder %v1164, inf
        %v1189 = vsel %vm1188, %v1164, %v1187
        %vm1190 = vcmp.eq.f32.partialorder %v1164, 0.0
        %v1191 = vand.u32 %v1164, 2147483648
        %v1192 = vsel %vm1190, %v1191, %v1189
        %v1193 = vrsqrt.pop %v1165
        %v1194 = vmul.f32 %v1165, %v1193
        %vm1195 = vcmp.eq.f32.partialorder %v1165, inf
        %v1196 = vsel %vm1195, %v1165, %v1194
        %vm1197 = vcmp.eq.f32.partialorder %v1165, 0.0
        %v1198 = vand.u32 %v1165, 2147483648
        %v1199 = vsel %vm1197, %v1198, %v1196
        %v1200 = vrsqrt.pop %v1166
        %v1201 = vmul.f32 %v1166, %v1200
        %vm1202 = vcmp.eq.f32.partialorder %v1166, inf
        %v1203 = vsel %vm1202, %v1166, %v1201
        %vm1204 = vcmp.eq.f32.partialorder %v1166, 0.0
        %v1205 = vand.u32 %v1166, 2147483648
        %v1206 = vsel %vm1204, %v1205, %v1203
        %v1207 = vrsqrt.pop %v1167
        %v1208 = vmul.f32 %v1167, %v1207
        %vm1209 = vcmp.eq.f32.partialorder %v1167, inf
        %v1210 = vsel %vm1209, %v1167, %v1208
        %vm1211 = vcmp.eq.f32.partialorder %v1167, 0.0
        %v1212 = vand.u32 %v1167, 2147483648
        %v1213 = vsel %vm1211, %v1212, %v1210
        %v1214 = vrsqrt.pop %v1168
        %v1215 = vmul.f32 %v1168, %v1214
        %vm1216 = vcmp.eq.f32.partialorder %v1168, inf
        %v1217 = vsel %vm1216, %v1168, %v1215
        %vm1218 = vcmp.eq.f32.partialorder %v1168, 0.0
        %v1219 = vand.u32 %v1168, 2147483648
        %v1220 = vsel %vm1218, %v1219, %v1217
        %v1221 = vrsqrt.pop %v1169
        %v1222 = vmul.f32 %v1169, %v1221
        %vm1223 = vcmp.eq.f32.partialorder %v1169, inf
        %v1224 = vsel %vm1223, %v1169, %v1222
        %vm1225 = vcmp.eq.f32.partialorder %v1169, 0.0
        %v1226 = vand.u32 %v1169, 2147483648
        %v1227 = vsel %vm1225, %v1226, %v1224
        %v1228 = vrsqrt.pop %v1170
        %v1229 = vmul.f32 %v1170, %v1228
        %vm1230 = vcmp.eq.f32.partialorder %v1170, inf
        %v1231 = vsel %vm1230, %v1170, %v1229
        %vm1232 = vcmp.eq.f32.partialorder %v1170, 0.0
        %v1233 = vand.u32 %v1170, 2147483648
        %v1234 = vsel %vm1232, %v1233, %v1231
        %v1235 = vrsqrt.pop %v1171
        %v1236 = vmul.f32 %v1171, %v1235
        %vm1237 = vcmp.eq.f32.partialorder %v1171, inf
        %v1238 = vsel %vm1237, %v1171, %v1236
        %vm1239 = vcmp.eq.f32.partialorder %v1171, 0.0
        %v1240 = vand.u32 %v1171, 2147483648
        %v1241 = vsel %vm1239, %v1240, %v1238
        %v1242 = vrsqrt.pop %v1172
        %v1243 = vmul.f32 %v1172, %v1242
        %vm1244 = vcmp.eq.f32.partialorder %v1172, inf
        %v1245 = vsel %vm1244, %v1172, %v1243
        %vm1246 = vcmp.eq.f32.partialorder %v1172, 0.0
        %v1247 = vand.u32 %v1172, 2147483648
        %v1248 = vsel %vm1246, %v1247, %v1245
        %v1249 = vrsqrt.pop %v1173
        %v1250 = vmul.f32 %v1173, %v1249
        %vm1251 = vcmp.eq.f32.partialorder %v1173, inf
        %v1252 = vsel %vm1251, %v1173, %v1250
        %vm1253 = vcmp.eq.f32.partialorder %v1173, 0.0
        %v1254 = vand.u32 %v1173, 2147483648
        %v1255 = vsel %vm1253, %v1254, %v1252
        %v1256 = vrsqrt.pop %v1174
        %v1257 = vmul.f32 %v1174, %v1256
        %vm1258 = vcmp.eq.f32.partialorder %v1174, inf
        %v1259 = vsel %vm1258, %v1174, %v1257
        %vm1260 = vcmp.eq.f32.partialorder %v1174, 0.0
        %v1261 = vand.u32 %v1174, 2147483648
        %v1262 = vsel %vm1260, %v1261, %v1259
        %v1263 = vrsqrt.pop %v1175
        %v1264 = vmul.f32 %v1175, %v1263
        %vm1265 = vcmp.eq.f32.partialorder %v1175, inf
        %v1266 = vsel %vm1265, %v1175, %v1264
        %vm1267 = vcmp.eq.f32.partialorder %v1175, 0.0
        %v1268 = vand.u32 %v1175, 2147483648
        %v1269 = vsel %vm1267, %v1268, %v1266
        %v1270 = vrsqrt.pop %v1176
        %v1271 = vmul.f32 %v1176, %v1270
        %vm1272 = vcmp.eq.f32.partialorder %v1176, inf
        %v1273 = vsel %vm1272, %v1176, %v1271
        %vm1274 = vcmp.eq.f32.partialorder %v1176, 0.0
        %v1275 = vand.u32 %v1176, 2147483648
        %v1276 = vsel %vm1274, %v1275, %v1273
        %v1277 = vrsqrt.pop %v1177
        %v1278 = vmul.f32 %v1177, %v1277
        %vm1279 = vcmp.eq.f32.partialorder %v1177, inf
        %v1280 = vsel %vm1279, %v1177, %v1278
        %vm1281 = vcmp.eq.f32.partialorder %v1177, 0.0
        %v1282 = vand.u32 %v1177, 2147483648
        %v1283 = vsel %vm1281, %v1282, %v1280
        %v1284 = vrsqrt.pop %v1178
        %v1285 = vmul.f32 %v1178, %v1284
        %vm1286 = vcmp.eq.f32.partialorder %v1178, inf
        %v1287 = vsel %vm1286, %v1178, %v1285
        %vm1288 = vcmp.eq.f32.partialorder %v1178, 0.0
        %v1289 = vand.u32 %v1178, 2147483648
        %v1290 = vsel %vm1288, %v1289, %v1287
        %v1291 = vmul.f32 %v1007, %v1007
        %v1292 = vmul.f32 %v1011, %v1011
        %v1293 = vmul.f32 %v1017, %v1017
        %v1294 = vmul.f32 %v1021, %v1021
        %v1295 = vmul.f32 %v1027, %v1027
        %v1296 = vmul.f32 %v1031, %v1031
        %v1297 = vmul.f32 %v1037, %v1037
        %v1298 = vmul.f32 %v1041, %v1041
        %v1299 = vmul.f32 %v1047, %v1047
        %v1300 = vmul.f32 %v1051, %v1051
        %v1301 = vmul.f32 %v1057, %v1057
        %v1302 = vmul.f32 %v1061, %v1061
        %v1303 = vmul.f32 %v1067, %v1067
        %v1304 = vmul.f32 %v1071, %v1071
        %v1305 = vmul.f32 %v1077, %v1077
        %v1306 = vmul.f32 %v1081, %v1081
        %1323 = vrot.lane.b32.xlu0 %v1291, 64
        %v1324 = vpop.permute.xlu0 %1323
        %1325 = vrot.lane.b32.xlu0 %v1292, 64
        %v1326 = vpop.permute.xlu0 %1325
        %1327 = vrot.lane.b32.xlu0 %v1293, 64
        %v1328 = vpop.permute.xlu0 %1327
        %1329 = vrot.lane.b32.xlu0 %v1294, 64
        %v1330 = vpop.permute.xlu0 %1329
        %1331 = vrot.lane.b32.xlu0 %v1295, 64
        %v1332 = vpop.permute.xlu0 %1331
        %1333 = vrot.lane.b32.xlu0 %v1296, 64
        %v1334 = vpop.permute.xlu0 %1333
        %1335 = vrot.lane.b32.xlu0 %v1297, 64
        %v1336 = vpop.permute.xlu0 %1335
        %1337 = vrot.lane.b32.xlu0 %v1298, 64
        %v1338 = vpop.permute.xlu0 %1337
        %1339 = vrot.lane.b32.xlu0 %v1299, 64
        %v1340 = vpop.permute.xlu0 %1339
        %1341 = vrot.lane.b32.xlu0 %v1300, 64
        %v1342 = vpop.permute.xlu0 %1341
        %1343 = vrot.lane.b32.xlu0 %v1301, 64
        %v1344 = vpop.permute.xlu0 %1343
        %1345 = vrot.lane.b32.xlu0 %v1302, 64
        %v1346 = vpop.permute.xlu0 %1345
        %1347 = vrot.lane.b32.xlu0 %v1303, 64
        %v1348 = vpop.permute.xlu0 %1347
        %1349 = vrot.lane.b32.xlu0 %v1304, 64
        %v1350 = vpop.permute.xlu0 %1349
        %1351 = vrot.lane.b32.xlu0 %v1305, 64
        %v1352 = vpop.permute.xlu0 %1351
        %1353 = vrot.lane.b32.xlu0 %v1306, 64
        %v1354 = vpop.permute.xlu0 %1353
        %v1371 = vadd.f32 %v1291, %v1324
        %v1372 = vadd.f32 %v1292, %v1326
        %v1373 = vadd.f32 %v1293, %v1328
        %v1374 = vadd.f32 %v1294, %v1330
        %v1375 = vadd.f32 %v1295, %v1332
        %v1376 = vadd.f32 %v1296, %v1334
        %v1377 = vadd.f32 %v1297, %v1336
        %v1378 = vadd.f32 %v1298, %v1338
        %v1379 = vadd.f32 %v1299, %v1340
        %v1380 = vadd.f32 %v1300, %v1342
        %v1381 = vadd.f32 %v1301, %v1344
        %v1382 = vadd.f32 %v1302, %v1346
        %v1383 = vadd.f32 %v1303, %v1348
        %v1384 = vadd.f32 %v1304, %v1350
        %v1385 = vadd.f32 %v1305, %v1352
        %v1386 = vadd.f32 %v1306, %v1354
        %v1387 = vrsqrt.pop %v1371
        %v1388 = vmul.f32 %v1371, %v1387
        %vm1389 = vcmp.eq.f32.partialorder %v1371, inf
        %v1390 = vsel %vm1389, %v1371, %v1388
        %vm1391 = vcmp.eq.f32.partialorder %v1371, 0.0
        %v1392 = vand.u32 %v1371, 2147483648
        %v1393 = vsel %vm1391, %v1392, %v1390
        %v1394 = vrsqrt.pop %v1372
        %v1395 = vmul.f32 %v1372, %v1394
        %vm1396 = vcmp.eq.f32.partialorder %v1372, inf
        %v1397 = vsel %vm1396, %v1372, %v1395
        %vm1398 = vcmp.eq.f32.partialorder %v1372, 0.0
        %v1399 = vand.u32 %v1372, 2147483648
        %v1400 = vsel %vm1398, %v1399, %v1397
        %v1401 = vrsqrt.pop %v1373
        %v1402 = vmul.f32 %v1373, %v1401
        %vm1403 = vcmp.eq.f32.partialorder %v1373, inf
        %v1404 = vsel %vm1403, %v1373, %v1402
        %vm1405 = vcmp.eq.f32.partialorder %v1373, 0.0
        %v1406 = vand.u32 %v1373, 2147483648
        %v1407 = vsel %vm1405, %v1406, %v1404
        %v1408 = vrsqrt.pop %v1374
        %v1409 = vmul.f32 %v1374, %v1408
        %vm1410 = vcmp.eq.f32.partialorder %v1374, inf
        %v1411 = vsel %vm1410, %v1374, %v1409
        %vm1412 = vcmp.eq.f32.partialorder %v1374, 0.0
        %v1413 = vand.u32 %v1374, 2147483648
        %v1414 = vsel %vm1412, %v1413, %v1411
        %v1415 = vrsqrt.pop %v1375
        %v1416 = vmul.f32 %v1375, %v1415
        %vm1417 = vcmp.eq.f32.partialorder %v1375, inf
        %v1418 = vsel %vm1417, %v1375, %v1416
        %vm1419 = vcmp.eq.f32.partialorder %v1375, 0.0
        %v1420 = vand.u32 %v1375, 2147483648
        %v1421 = vsel %vm1419, %v1420, %v1418
        %v1422 = vrsqrt.pop %v1376
        %v1423 = vmul.f32 %v1376, %v1422
        %vm1424 = vcmp.eq.f32.partialorder %v1376, inf
        %v1425 = vsel %vm1424, %v1376, %v1423
        %vm1426 = vcmp.eq.f32.partialorder %v1376, 0.0
        %v1427 = vand.u32 %v1376, 2147483648
        %v1428 = vsel %vm1426, %v1427, %v1425
        %v1429 = vrsqrt.pop %v1377
        %v1430 = vmul.f32 %v1377, %v1429
        %vm1431 = vcmp.eq.f32.partialorder %v1377, inf
        %v1432 = vsel %vm1431, %v1377, %v1430
        %vm1433 = vcmp.eq.f32.partialorder %v1377, 0.0
        %v1434 = vand.u32 %v1377, 2147483648
        %v1435 = vsel %vm1433, %v1434, %v1432
        %v1436 = vrsqrt.pop %v1378
        %v1437 = vmul.f32 %v1378, %v1436
        %vm1438 = vcmp.eq.f32.partialorder %v1378, inf
        %v1439 = vsel %vm1438, %v1378, %v1437
        %vm1440 = vcmp.eq.f32.partialorder %v1378, 0.0
        %v1441 = vand.u32 %v1378, 2147483648
        %v1442 = vsel %vm1440, %v1441, %v1439
        %v1443 = vrsqrt.pop %v1379
        %v1444 = vmul.f32 %v1379, %v1443
        %vm1445 = vcmp.eq.f32.partialorder %v1379, inf
        %v1446 = vsel %vm1445, %v1379, %v1444
        %vm1447 = vcmp.eq.f32.partialorder %v1379, 0.0
        %v1448 = vand.u32 %v1379, 2147483648
        %v1449 = vsel %vm1447, %v1448, %v1446
        %v1450 = vrsqrt.pop %v1380
        %v1451 = vmul.f32 %v1380, %v1450
        %vm1452 = vcmp.eq.f32.partialorder %v1380, inf
        %v1453 = vsel %vm1452, %v1380, %v1451
        %vm1454 = vcmp.eq.f32.partialorder %v1380, 0.0
        %v1455 = vand.u32 %v1380, 2147483648
        %v1456 = vsel %vm1454, %v1455, %v1453
        %v1457 = vrsqrt.pop %v1381
        %v1458 = vmul.f32 %v1381, %v1457
        %vm1459 = vcmp.eq.f32.partialorder %v1381, inf
        %v1460 = vsel %vm1459, %v1381, %v1458
        %vm1461 = vcmp.eq.f32.partialorder %v1381, 0.0
        %v1462 = vand.u32 %v1381, 2147483648
        %v1463 = vsel %vm1461, %v1462, %v1460
        %v1464 = vrsqrt.pop %v1382
        %v1465 = vmul.f32 %v1382, %v1464
        %vm1466 = vcmp.eq.f32.partialorder %v1382, inf
        %v1467 = vsel %vm1466, %v1382, %v1465
        %vm1468 = vcmp.eq.f32.partialorder %v1382, 0.0
        %v1469 = vand.u32 %v1382, 2147483648
        %v1470 = vsel %vm1468, %v1469, %v1467
        %v1471 = vrsqrt.pop %v1383
        %v1472 = vmul.f32 %v1383, %v1471
        %vm1473 = vcmp.eq.f32.partialorder %v1383, inf
        %v1474 = vsel %vm1473, %v1383, %v1472
        %vm1475 = vcmp.eq.f32.partialorder %v1383, 0.0
        %v1476 = vand.u32 %v1383, 2147483648
        %v1477 = vsel %vm1475, %v1476, %v1474
        %v1478 = vrsqrt.pop %v1384
        %v1479 = vmul.f32 %v1384, %v1478
        %vm1480 = vcmp.eq.f32.partialorder %v1384, inf
        %v1481 = vsel %vm1480, %v1384, %v1479
        %vm1482 = vcmp.eq.f32.partialorder %v1384, 0.0
        %v1483 = vand.u32 %v1384, 2147483648
        %v1484 = vsel %vm1482, %v1483, %v1481
        %v1485 = vrsqrt.pop %v1385
        %v1486 = vmul.f32 %v1385, %v1485
        %vm1487 = vcmp.eq.f32.partialorder %v1385, inf
        %v1488 = vsel %vm1487, %v1385, %v1486
        %vm1489 = vcmp.eq.f32.partialorder %v1385, 0.0
        %v1490 = vand.u32 %v1385, 2147483648
        %v1491 = vsel %vm1489, %v1490, %v1488
        %v1492 = vrsqrt.pop %v1386
        %v1493 = vmul.f32 %v1386, %v1492
        %vm1494 = vcmp.eq.f32.partialorder %v1386, inf
        %v1495 = vsel %vm1494, %v1386, %v1493
        %vm1496 = vcmp.eq.f32.partialorder %v1386, 0.0
        %v1497 = vand.u32 %v1386, 2147483648
        %v1498 = vsel %vm1496, %v1497, %v1495
        %v1499 = vsub.f32 %v1185, %v1393
        %v1500 = vsub.f32 %v1192, %v1400
        %v1501 = vsub.f32 %v1199, %v1407
        %v1502 = vsub.f32 %v1206, %v1414
        %v1503 = vsub.f32 %v1213, %v1421
        %v1504 = vsub.f32 %v1220, %v1428
        %v1505 = vsub.f32 %v1227, %v1435
        %v1506 = vsub.f32 %v1234, %v1442
        %v1507 = vsub.f32 %v1241, %v1449
        %v1508 = vsub.f32 %v1248, %v1456
        %v1509 = vsub.f32 %v1255, %v1463
        %v1510 = vsub.f32 %v1262, %v1470
        %v1511 = vsub.f32 %v1269, %v1477
        %v1512 = vsub.f32 %v1276, %v1484
        %v1513 = vsub.f32 %v1283, %v1491
        %v1514 = vsub.f32 %v1290, %v1498
        %v1515 = vand.u32 2147483647, %v1499
        %v1516 = vand.u32 2147483647, %v1500
        %v1517 = vand.u32 2147483647, %v1501
        %v1518 = vand.u32 2147483647, %v1502
        %v1519 = vand.u32 2147483647, %v1503
        %v1520 = vand.u32 2147483647, %v1504
        %v1521 = vand.u32 2147483647, %v1505
        %v1522 = vand.u32 2147483647, %v1506
        %v1523 = vand.u32 2147483647, %v1507
        %v1524 = vand.u32 2147483647, %v1508
        %v1525 = vand.u32 2147483647, %v1509
        %v1526 = vand.u32 2147483647, %v1510
        %v1527 = vand.u32 2147483647, %v1511
        %v1528 = vand.u32 2147483647, %v1512
        %v1529 = vand.u32 2147483647, %v1513
        %v1530 = vand.u32 2147483647, %v1514
        %v1531 = vsub.f32 %v1005, %v1007
        %v1532 = vsub.f32 %v1009, %v1011
        %v1533 = vsub.f32 %v1015, %v1017
        %v1534 = vsub.f32 %v1019, %v1021
        %v1535 = vsub.f32 %v1025, %v1027
        %v1536 = vsub.f32 %v1029, %v1031
        %v1537 = vsub.f32 %v1035, %v1037
        %v1538 = vsub.f32 %v1039, %v1041
        %v1539 = vsub.f32 %v1045, %v1047
        %v1540 = vsub.f32 %v1049, %v1051
        %v1541 = vsub.f32 %v1055, %v1057
        %v1542 = vsub.f32 %v1059, %v1061
        %v1543 = vsub.f32 %v1065, %v1067
        %v1544 = vsub.f32 %v1069, %v1071
        %v1545 = vsub.f32 %v1075, %v1077
        %v1546 = vsub.f32 %v1079, %v1081
        %v1547 = vsub.f32 %v1539, %v1531
        %v1548 = vsub.f32 %v1540, %v1532
        %v1549 = vsub.f32 %v1541, %v1533
        %v1550 = vsub.f32 %v1542, %v1534
        %v1551 = vsub.f32 %v1543, %v1535
        %v1552 = vsub.f32 %v1544, %v1536
        %v1553 = vsub.f32 %v1545, %v1537
        %v1554 = vsub.f32 %v1546, %v1538
        %v1555 = vmul.f32 %v1547, %v1547
        %v1556 = vmul.f32 %v1548, %v1548
        %v1557 = vmul.f32 %v1549, %v1549
        %v1558 = vmul.f32 %v1550, %v1550
        %v1559 = vmul.f32 %v1551, %v1551
        %v1560 = vmul.f32 %v1552, %v1552
        %v1561 = vmul.f32 %v1553, %v1553
        %v1562 = vmul.f32 %v1554, %v1554
        %1571 = vrot.lane.b32.xlu0 %v1555, 64
        %v1572 = vpop.permute.xlu0 %1571
        %1573 = vrot.lane.b32.xlu0 %v1556, 64
        %v1574 = vpop.permute.xlu0 %1573
        %1575 = vrot.lane.b32.xlu0 %v1557, 64
        %v1576 = vpop.permute.xlu0 %1575
        %1577 = vrot.lane.b32.xlu0 %v1558, 64
        %v1578 = vpop.permute.xlu0 %1577
        %1579 = vrot.lane.b32.xlu0 %v1559, 64
        %v1580 = vpop.permute.xlu0 %1579
        %1581 = vrot.lane.b32.xlu0 %v1560, 64
        %v1582 = vpop.permute.xlu0 %1581
        %1583 = vrot.lane.b32.xlu0 %v1561, 64
        %v1584 = vpop.permute.xlu0 %1583
        %1585 = vrot.lane.b32.xlu0 %v1562, 64
        %v1586 = vpop.permute.xlu0 %1585
        %v1595 = vadd.f32 %v1555, %v1572
        %v1596 = vadd.f32 %v1556, %v1574
        %v1597 = vadd.f32 %v1557, %v1576
        %v1598 = vadd.f32 %v1558, %v1578
        %v1599 = vadd.f32 %v1559, %v1580
        %v1600 = vadd.f32 %v1560, %v1582
        %v1601 = vadd.f32 %v1561, %v1584
        %v1602 = vadd.f32 %v1562, %v1586
        %v1603 = vrsqrt.pop %v1595
        %v1604 = vmul.f32 %v1595, %v1603
        %vm1605 = vcmp.eq.f32.partialorder %v1595, inf
        %v1606 = vsel %vm1605, %v1595, %v1604
        %vm1607 = vcmp.eq.f32.partialorder %v1595, 0.0
        %v1608 = vand.u32 %v1595, 2147483648
        %v1609 = vsel %vm1607, %v1608, %v1606
        %v1610 = vrsqrt.pop %v1596
        %v1611 = vmul.f32 %v1596, %v1610
        %vm1612 = vcmp.eq.f32.partialorder %v1596, inf
        %v1613 = vsel %vm1612, %v1596, %v1611
        %vm1614 = vcmp.eq.f32.partialorder %v1596, 0.0
        %v1615 = vand.u32 %v1596, 2147483648
        %v1616 = vsel %vm1614, %v1615, %v1613
        %v1617 = vrsqrt.pop %v1597
        %v1618 = vmul.f32 %v1597, %v1617
        %vm1619 = vcmp.eq.f32.partialorder %v1597, inf
        %v1620 = vsel %vm1619, %v1597, %v1618
        %vm1621 = vcmp.eq.f32.partialorder %v1597, 0.0
        %v1622 = vand.u32 %v1597, 2147483648
        %v1623 = vsel %vm1621, %v1622, %v1620
        %v1624 = vrsqrt.pop %v1598
        %v1625 = vmul.f32 %v1598, %v1624
        %vm1626 = vcmp.eq.f32.partialorder %v1598, inf
        %v1627 = vsel %vm1626, %v1598, %v1625
        %vm1628 = vcmp.eq.f32.partialorder %v1598, 0.0
        %v1629 = vand.u32 %v1598, 2147483648
        %v1630 = vsel %vm1628, %v1629, %v1627
        %v1631 = vrsqrt.pop %v1599
        %v1632 = vmul.f32 %v1599, %v1631
        %vm1633 = vcmp.eq.f32.partialorder %v1599, inf
        %v1634 = vsel %vm1633, %v1599, %v1632
        %vm1635 = vcmp.eq.f32.partialorder %v1599, 0.0
        %v1636 = vand.u32 %v1599, 2147483648
        %v1637 = vsel %vm1635, %v1636, %v1634
        %v1638 = vrsqrt.pop %v1600
        %v1639 = vmul.f32 %v1600, %v1638
        %vm1640 = vcmp.eq.f32.partialorder %v1600, inf
        %v1641 = vsel %vm1640, %v1600, %v1639
        %vm1642 = vcmp.eq.f32.partialorder %v1600, 0.0
        %v1643 = vand.u32 %v1600, 2147483648
        %v1644 = vsel %vm1642, %v1643, %v1641
        %v1645 = vrsqrt.pop %v1601
        %v1646 = vmul.f32 %v1601, %v1645
        %vm1647 = vcmp.eq.f32.partialorder %v1601, inf
        %v1648 = vsel %vm1647, %v1601, %v1646
        %vm1649 = vcmp.eq.f32.partialorder %v1601, 0.0
        %v1650 = vand.u32 %v1601, 2147483648
        %v1651 = vsel %vm1649, %v1650, %v1648
        %v1652 = vrsqrt.pop %v1602
        %v1653 = vmul.f32 %v1602, %v1652
        %vm1654 = vcmp.eq.f32.partialorder %v1602, inf
        %v1655 = vsel %vm1654, %v1602, %v1653
        %vm1656 = vcmp.eq.f32.partialorder %v1602, 0.0
        %v1657 = vand.u32 %v1602, 2147483648
        %v1658 = vsel %vm1656, %v1657, %v1655
        %v1659 = vsel %vm849, %v1515, 0.0
        %v1660 = vsel %vm849, %v1516, 0.0
        %v1661 = vadd.f32 %v1659, %v1660
        %v1662 = vsel %vm849, %v1517, 0.0
        %v1663 = vadd.f32 %v1661, %v1662
        %v1664 = vsel %vm849, %v1518, 0.0
        %v1665 = vadd.f32 %v1663, %v1664
        %v1666 = vsel %vm849, %v1519, 0.0
        %v1667 = vadd.f32 %v1665, %v1666
        %v1668 = vsel %vm849, %v1520, 0.0
        %v1669 = vadd.f32 %v1667, %v1668
        %v1670 = vsel %vm849, %v1521, 0.0
        %v1671 = vadd.f32 %v1669, %v1670
        %v1672 = vsel %vm849, %v1522, 0.0
        %v1673 = vadd.f32 %v1671, %v1672
        %v1674 = vsel %vm849, %v1523, 0.0
        %v1675 = vadd.f32 %v1673, %v1674
        %v1676 = vsel %vm849, %v1524, 0.0
        %v1677 = vadd.f32 %v1675, %v1676
        %v1678 = vsel %vm849, %v1525, 0.0
        %v1679 = vadd.f32 %v1677, %v1678
        %v1680 = vsel %vm849, %v1526, 0.0
        %v1681 = vadd.f32 %v1679, %v1680
        %v1682 = vsel %vm849, %v1527, 0.0
        %v1683 = vadd.f32 %v1681, %v1682
        %v1684 = vsel %vm849, %v1528, 0.0
        %v1685 = vadd.f32 %v1683, %v1684
        %v1686 = vsel %vm849, %v1529, 0.0
        %v1687 = vadd.f32 %v1685, %v1686
        %v1688 = vsel %vm849, %v1530, 0.0
        %v1689 = vadd.f32 %v1687, %v1688
        %v1690 = vrot.slane %v1689, 4
        %v1691 = vadd.f32 %v1689, %v1690
        %v1692 = vrot.slane %v1691, 2
        %v1693 = vadd.f32 %v1691, %v1692
        %v1694 = vrot.slane %v1693, 1
        %v1695 = vadd.f32 %v1693, %v1694
        %v1696 = vsel %vm849, %v1609, 0.0
        %v1697 = vsel %vm849, %v1616, 0.0
        %v1698 = vadd.f32 %v1696, %v1697
        %v1699 = vsel %vm849, %v1623, 0.0
        %v1700 = vadd.f32 %v1698, %v1699
        %v1701 = vsel %vm849, %v1630, 0.0
        %v1702 = vadd.f32 %v1700, %v1701
        %v1703 = vsel %vm849, %v1637, 0.0
        %v1704 = vadd.f32 %v1702, %v1703
        %v1705 = vsel %vm849, %v1644, 0.0
        %v1706 = vadd.f32 %v1704, %v1705
        %v1707 = vsel %vm849, %v1651, 0.0
        %v1708 = vadd.f32 %v1706, %v1707
        %v1709 = vsel %vm849, %v1658, 0.0
        %v1710 = vadd.f32 %v1708, %v1709
        %v1711 = vrot.slane %v1710, 4
        %v1712 = vadd.f32 %v1710, %v1711
        %v1713 = vrot.slane %v1712, 2
        %v1714 = vadd.f32 %v1712, %v1713
        %v1715 = vrot.slane %v1714, 1
        %v1716 = vadd.f32 %v1714, %v1715
        %v1717 = vlaneseq
        %v1718 = vand.u32 %v1717, 127
        %s1719 = smul.u32 %s21, 8
        %v1720 = vstv %s1719
        %v1721 = vadd.s32 %v1720, %v483
        %v1722 = vmul.u32 %v1721, 128
        %v1723 = vadd.s32 %v1722, %v1718
        %vm1724 = vcmp.ge.s32.totalorder %v1723, 32
        %vm1725 = vcmp.lt.s32.totalorder %v1723, 288
        %vm1726 = vmand %vm1724, %vm1725
        %v1727 = vsel %vm1726, 1, 0
        %v1728 = vcvt.s32.f32 %v1727
        %v1729 = vsub.f32 %v525, %v677
        %v1730 = vand.u32 2147483647, %v1729
        %v1731 = vsub.f32 %v572, %v721
        %v1732 = vand.u32 2147483647, %v1731
        %v1733 = vadd.f32 %v1730, %v1732
        %v1734 = vmul.f32 %v1733, %v1728
        %v1735 = vrot.slane %v1734, 4
        %v1736 = vadd.f32 %v1734, %v1735
        %v1737 = vrot.slane %v1736, 2
        %v1738 = vadd.f32 %v1736, %v1737
        %v1739 = vrot.slane %v1738, 1
        %v1740 = vadd.f32 %v1738, %v1739
        %1742 = vrot.lane.b32.xlu0 %v1716, 64
        %v1743 = vpop.permute.xlu0 %1742
        %v1745 = vsel %vm849, %v1695, %v1743
        %v1747 = vrot.slane %v1745, 7
        %vm1749 = vcmask 1040384
        %v1750 = vsel %vm1749, %v1740, %v1747
        %vm1751 = vcmask 1041408
        %v1752 = vsel %vm1751, %v1750, 0.0
        %1753 = vst [vmem:[%s478] sm:$0xff] %v1752
        %p1754 = scmp.lt.s32.totalorder %s20, 1
        %s1755 = scalar_select %p1754, %s20, 1
        %p1756 = scmp.lt.s32.totalorder %s21, 0
        %s1757 = scalar_select %p1756, %s21, 0
        %s1758 = sadd.s32 %s1757, %s1755
        %s1759 = smul.addr %s1758, 8
        %s1760 = scalar_lea.vmem %s5, %s1759
        // Predicated region
        $region193: #{scl_loss.1} parent=175 // pred_check
          %p1761 = pneg %p185
        $region194: #{scl_loss.1} parent=175 // pred_check_branch
          %1763 = sbr.rel (%p1761) target = $region196
        $region195: #{scl_loss.1} parent=175 // pred_region
          _
        $region196: #{scl_loss.1} parent=175 // pred_fallthru
          _
      $region176: #{scl_loss.1} parent=5 // pred_fallthru
        _
      %p1764 = scmp.le.s32.totalorder 2, %s11
      // Predicated region
      $region197: #{scl_loss.1} parent=5 // pred_check
        %p1765 = pneg %p1764
      $region198: #{scl_loss.1} parent=5 // pred_check_branch
        %1767 = sbr.rel (%p1765) target = $region200
      $region199: #{scl_loss.1} parent=5 // pred_region
        %s1768 = ssub.s32 %s11, 2
        // Predicated region
        $region201: #{scl_loss.1} parent=199 // pred_check
          %p1769 = pneg %p191
        $region202: #{scl_loss.1} parent=199 // pred_check_branch
          %1771 = sbr.rel (%p1769) target = $region204
        $region203: #{scl_loss.1} parent=199 // pred_region
          %p1772 = scmp.lt.s32.totalorder %s22, 1
          %s1773 = scalar_select %p1772, %s22, 1
          %p1774 = scmp.lt.s32.totalorder %s23, 0
          %s1775 = scalar_select %p1774, %s23, 0
          %s1776 = sadd.s32 %s1775, %s1773
          %s1777 = smul.addr %s1776, 8
          %s1778 = scalar_lea.vmem %s5, %s1777
        $region204: #{scl_loss.1} parent=199 // pred_fallthru
          _
      $region200: #{scl_loss.1} parent=5 // pred_fallthru
        _
    $region6: #{scl_loss.1} parent=1 // loop_footer
      %s15 = sadd.s32 1, %s11
    $region7: #{scl_loss.1} parent=1 // loop_footer_branch
      %10 = sbr.rel target = $region3
    $region8: #{scl_loss.1} parent=1 // loop_exit
      _

</llo_original>
